<compile_context>
chip_gen: v7x
topology: tpu7x:2x2x1
jax: 0.10.0
libtpu: 0.0.40
codegen_flags: <defaults>
</compile_context>

<pallas_src>
import functools
import math

import jax
import jax.numpy as jnp
from jax.experimental import pallas as pl
from jax.experimental.pallas import tpu as pltpu


_VMEM_LIMIT = 48 * 1024 * 1024   # fits the 64 MiB/TC budget of v7x with headroom


# ------------------------------ tiling helpers ------------------------------ #

def _tile(dim, target, align):
    """Largest multiple of `align` that divides `dim` and is <= `target`.

    Falls back to `dim` itself (a full-extent block, always legal under the
    (8,128) block-shape rule) when `dim` is small or has no such divisor.
    """
    if dim <= target:
        return dim
    t = (target // align) * align
    while t >= align:
        if dim % t == 0:
            return t
        t -= align
    return dim


def _pick_head_block(num_heads, head_dim, cols_target=256):
    """Heads packed per attention block.

    Chosen so that the folded head-merge output block (tq, hb*head_dim) is
    lane-dense (hb*head_dim a multiple of 128) and not wider than
    `cols_target`. Falls back to the full head axis (hb*head_dim == C), which
    is always a legal full-extent block.
    """
    best = None
    for hb in range(1, num_heads + 1):
        if num_heads % hb:
            continue
        cols = hb * head_dim
        if cols % 128 == 0 and cols <= cols_target:
            best = hb
    return best if best is not None else num_heads


# --------------------------- tiled linear kernels --------------------------- #

def _matmul_kernel(x_ref, w_ref, o_ref, acc_ref):
    # Grid: (M/tm, Nout/tn, K/tk); K is the innermost reduction axis.
    @pl.when(pl.program_id(2) == 0)
    def _init():
        acc_ref[...] = jnp.zeros(acc_ref.shape, acc_ref.dtype)

    # bf16 tiles in, f32 accumulation (MXU-native on v5e/v6e/v7x).
    acc_ref[...] += jnp.dot(x_ref[...], w_ref[...],
                            preferred_element_type=jnp.float32)

    @pl.when(pl.program_id(2) == pl.num_programs(2) - 1)
    def _done():
        o_ref[...] = acc_ref[...].astype(o_ref.dtype)


def _matmul_bias_kernel(x_ref, w_ref, b_ref, o_ref, acc_ref):
    @pl.when(pl.program_id(2) == 0)
    def _init():
        acc_ref[...] = jnp.zeros(acc_ref.shape, acc_ref.dtype)

    acc_ref[...] += jnp.dot(x_ref[...], w_ref[...],
                            preferred_element_type=jnp.float32)

    @pl.when(pl.program_id(2) == pl.num_programs(2) - 1)
    def _done():
        o_ref[...] = (acc_ref[...] + b_ref[...].astype(jnp.float32)).astype(o_ref.dtype)


def pallas_linear(x2d, w_t, bias=None, *, out_dtype=None,
                  tm_target=512, tn_target=512, tk_target=512):
    """x2d: (M, K), w_t: (K, Nout) [already transposed weight], bias: (Nout,)."""
    M, K = x2d.shape
    K2, Nout = w_t.shape
    assert K == K2
    out_dtype = out_dtype or x2d.dtype

    tm = _tile(M, tm_target, 8)        # sublane-aligned
    tn = _tile(Nout, tn_target, 128)   # lane-aligned
    tk = _tile(K, tk_target, 128)
    grid = (M // tm, Nout // tn, K // tk)

    x_spec = pl.BlockSpec((tm, tk), lambda i, j, k: (i, k))
    w_spec = pl.BlockSpec((tk, tn), lambda i, j, k: (k, j))
    o_spec = pl.BlockSpec((tm, tn), lambda i, j, k: (i, j))

    cost = pl.CostEstimate(
        flops=2 * M * K * Nout,
        transcendentals=0,
        bytes_accessed=(x2d.dtype.itemsize * M * K
                        + w_t.dtype.itemsize * K * Nout
                        + jnp.dtype(out_dtype).itemsize * M * Nout),
    )
    cparams = pltpu.CompilerParams(
        dimension_semantics=("parallel", "parallel", "arbitrary"),
        vmem_limit_bytes=_VMEM_LIMIT,
    )
    out_shape = jax.ShapeDtypeStruct((M, Nout), out_dtype)

    if bias is None:
        return pl.pallas_call(
            _matmul_kernel,
            out_shape=out_shape,
            grid_spec=pltpu.PrefetchScalarGridSpec(
                num_scalar_prefetch=0,
                grid=grid,
                in_specs=[x_spec, w_spec],
                out_specs=o_spec,
                scratch_shapes=[pltpu.VMEM((tm, tn), jnp.float32)],
            ),
            compiler_params=cparams,
            cost_estimate=cost,
        )(x2d, w_t)

    b2d = bias.reshape(1, Nout)
    b_spec = pl.BlockSpec((1, tn), lambda i, j, k: (0, j))
    return pl.pallas_call(
        _matmul_bias_kernel,
        out_shape=out_shape,
        grid_spec=pltpu.PrefetchScalarGridSpec(
            num_scalar_prefetch=0,
            grid=grid,
            in_specs=[x_spec, w_spec, b_spec],
            out_specs=o_spec,
            scratch_shapes=[pltpu.VMEM((tm, tn), jnp.float32)],
        ),
        compiler_params=cparams,
        cost_estimate=cost,
    )(x2d, w_t, b2d)


# ------------------------- flash attention (forward) ------------------------ #

def _flash_attn_kernel(q_ref, k_ref, v_ref, o_ref, m_sc, l_sc, acc_sc):
    # q_ref: (1, hb, tq, d); k_ref/v_ref: (1, hb, tk, d); o_ref: (1, tq, hb*d)
    kv = pl.program_id(3)

    @pl.when(kv == 0)
    def _init():
        m_sc[...] = jnp.full(m_sc.shape, -jnp.inf, m_sc.dtype)
        l_sc[...] = jnp.zeros(l_sc.shape, l_sc.dtype)
        acc_sc[...] = jnp.zeros(acc_sc.shape, acc_sc.dtype)

    # Softmax scale is pre-folded into the Q rows of the QKV weight, so q is
    # used as-is (no per-KV-step VPU rescale).
    q = q_ref[0]                                                # (hb, tq, d) bf16
    # Batched contraction over head_dim -> no explicit transpose of K.
    s = jnp.einsum("hqd,hkd->hqk", q, k_ref[0],
                   preferred_element_type=jnp.float32)          # (hb, tq, tk) f32

    m_prev = m_sc[...]                                          # (hb, tq, 1)
    m_new = jnp.maximum(m_prev, jnp.max(s, axis=-1, keepdims=True))
    alpha = jnp.exp(m_prev - m_new)                             # (hb, tq, 1)
    # TODO(synk): on v6e/v7x a bf16 exp argument ~doubles EUP throughput (the
    # binding unit at head_dim=64); kept f32 here so the same kernel is also
    # right for v5e (no bf16 EUP) and for accuracy.
    p = jnp.exp(s - m_new)                                      # (hb, tq, tk)

    l_sc[...] = alpha * l_sc[...] + jnp.sum(p, axis=-1, keepdims=True)
    acc_sc[...] = alpha * acc_sc[...] + jnp.einsum(
        "hqk,hkd->hqd", p.astype(v_ref.dtype), v_ref[0],
        preferred_element_type=jnp.float32)                     # (hb, tq, d)
    m_sc[...] = m_new

    @pl.when(kv == pl.num_programs(3) - 1)
    def _finalize():
        hb, tq, d = acc_sc.shape
        # Exact reciprocal: runs once per q tile -> negligible, tight accuracy.
        o = (acc_sc[...] / l_sc[...]).astype(o_ref.dtype)       # (hb, tq, d)
        # Fold 'b h n d -> b n (h d)' into the output store: heads land side by
        # side along lanes, so the HBM write block is lane-dense (tq, hb*d).
        for h in range(hb):                                     # hb is static
            o_ref[0, :, h * d:(h + 1) * d] = o[h]


def pallas_flash_attention(q, k, v, *, hb_cols_target=256, tq_target=256, tk_target=512):
    """q, k, v: (B, H, N, d) -> (B, N, H*d). Online-softmax attention with the
    head merge folded into the (lane-dense) output BlockSpec."""
    B, H, N, d = q.shape
    C = H * d

    hb = _pick_head_block(H, d, hb_cols_target)  # heads packed per block
    tq = _tile(N, tq_target, 8)
    tk = _tile(N, tk_target, 128)
    if tk == N and N > tk_target:                # no 128-aligned divisor: 8-aligned
        tk = _tile(N, tk_target, 8)
    # TODO(synk): for awkward N with no aligned divisor the fallback is a
    # full-extent (hb, tq, N) score tile; pad N instead if that exceeds VMEM.

    grid = (B, H // hb, N // tq, N // tk)        # KV axis last (reduction)

    q_spec = pl.BlockSpec((1, hb, tq, d), lambda b, g, qi, kvi: (b, g, qi, 0))
    kv_spec = pl.BlockSpec((1, hb, tk, d), lambda b, g, qi, kvi: (b, g, kvi, 0))
    # Output is (B, N, C); head-group g writes columns [g*hb*d, (g+1)*hb*d).
    o_spec = pl.BlockSpec((1, tq, hb * d), lambda b, g, qi, kvi: (b, qi, g))

    itemsize = q.dtype.itemsize
    kv_passes = N // tq                          # K/V are re-streamed per q tile
    cost = pl.CostEstimate(
        flops=4 * B * H * N * N * d,             # QK^T + PV
        transcendentals=B * H * N * N,           # exp
        bytes_accessed=itemsize * (B * H * N * d
                                   + 2 * kv_passes * B * H * N * d
                                   + B * N * C),
    )
    return pl.pallas_call(
        _flash_attn_kernel,
        out_shape=jax.ShapeDtypeStruct((B, N, C), q.dtype),
        grid_spec=pltpu.PrefetchScalarGridSpec(
            num_scalar_prefetch=0,
            grid=grid,
            in_specs=[q_spec, kv_spec, kv_spec],
            out_specs=o_spec,
            scratch_shapes=[
                pltpu.VMEM((hb, tq, 1), jnp.float32),   # running max  m
                pltpu.VMEM((hb, tq, 1), jnp.float32),   # running sum  l
                pltpu.VMEM((hb, tq, d), jnp.float32),   # accumulator
            ],
        ),
        compiler_params=pltpu.CompilerParams(
            dimension_semantics=("parallel", "parallel", "parallel", "arbitrary"),
            vmem_limit_bytes=_VMEM_LIMIT,
        ),
        cost_estimate=cost,
    )(q, k, v)


# ------------------------------ module forward ------------------------------ #

def memory_efficient_attention(x, w_qkv, w_proj, b_proj, num_heads):
    """Forward pass of MemoryEfficientAttention (eval mode, mask=None).

    x:      (B, N, C)
    w_qkv:  (3C, C)   -- nn.Linear weight (qkv_bias=False)
    w_proj: (C, C), b_proj: (C,)
    """
    B, N, C = x.shape
    assert C % num_heads == 0
    head_dim = C // num_heads
    scale = head_dim ** (-0.5)

    # Fold the softmax scale into the Q rows of the QKV weight (static, free)
    # and cast activations/weights to bf16 at the boundary: the MXU runs at
    # bf16 peak with f32 accumulation, and HBM/DMA traffic is halved.
    w_qkv_scaled = w_qkv.at[:C, :].multiply(scale)              # Q rows only
    w_qkv_t = jnp.transpose(w_qkv_scaled).astype(jnp.bfloat16)  # (C, 3C)
    w_proj_t = jnp.transpose(w_proj).astype(jnp.bfloat16)       # (C, C)
    x2d = x.reshape(B * N, C).astype(jnp.bfloat16)

    # 1) QKV projection (tiled/pipelined matmul, bf16 in / f32 acc / bf16 out).
    qkv = pallas_linear(x2d, w_qkv_t, out_dtype=jnp.bfloat16)   # (B*N, 3C)

    # 2) Split heads: 'b n (three h d) -> three b h n d' (bf16 relayout).
    # TODO(synk): this transpose is still an XLA HBM pass (now in bf16); it
    # could be folded into the attention input BlockSpecs at the cost of
    # per-KV-step in-kernel head de-interleaving.
    qkv = qkv.reshape(B, N, 3, num_heads, head_dim)
    qkv = jnp.transpose(qkv, (2, 0, 3, 1, 4))                   # (3, B, H, N, d)
    q, k, v = qkv[0], qkv[1], qkv[2]

    # 3) Flash attention: output is (B, N, C) with the '(b h) n d -> b n (h d)'
    #    merge folded into a lane-dense output BlockSpec.
    attn = pallas_flash_attention(q, k, v)                      # (B, N, C) bf16

    # 4) Output projection with bias (f32 result, matching the input dtype).
    out = pallas_linear(attn.reshape(B * N, C), w_proj_t, b_proj, out_dtype=x.dtype)
    return out.reshape(B, N, C)


# TODO(synk): attention_dropout (rate 0.0 / eval mode) and the optional mask
# argument are not implemented; this is the mask=None, eval-mode forward pass.

# --------------------------------- Driver ----------------------------------- #

if __name__ == "__main__":
    B, N, C = 2, 8, 32
    num_heads = 8

    key = jax.random.PRNGKey(0)
    kx, kqkv, kproj_w, kproj_b = jax.random.split(key, 4)

    x = jax.random.normal(kx, (B, N, C), dtype=jnp.float32)
    w_qkv = jax.random.normal(kqkv, (3 * C, C), dtype=jnp.float32) * (1.0 / math.sqrt(C))
    w_proj = jax.random.normal(kproj_w, (C, C), dtype=jnp.float32) * (1.0 / math.sqrt(C))
    b_proj = jax.random.normal(kproj_b, (C,), dtype=jnp.float32) * 0.01

    fwd = jax.jit(functools.partial(memory_efficient_attention, num_heads=num_heads))
    out = fwd(x, w_qkv, w_proj, b_proj)
    jax.block_until_ready(out)

    # Pure-f32 JAX reference (same math, no Pallas, no bf16).
    def ref(x):
        head_dim = C // num_heads
        scale = head_dim ** (-0.5)
        qkv = x.reshape(B * N, C) @ w_qkv.T
        qkv = qkv.reshape(B, N, 3, num_heads, head_dim).transpose(2, 0, 3, 1, 4)
        q, k, v = qkv[0], qkv[1], qkv[2]
        s = jnp.einsum("bhnd,bhmd->bhnm", q, k) * scale
        p = jax.nn.softmax(s, axis=-1)
        o = jnp.einsum("bhnm,bhmd->bhnd", p, v)
        o = o.transpose(0, 2, 1, 3).reshape(B * N, C)
        return (o @ w_proj.T + b_proj).reshape(B, N, C)

    ref_out = ref(x)
    # Reciprocal is now exact; remaining tolerance covers the bf16 MXU-input
    # quantization of activations/weights vs the f32 reference.
    assert jnp.allclose(out, ref_out, atol=5e-2, rtol=5e-2), "mismatch vs reference"

    print("KERNEL_OK")
</pallas_src>

<mosaic_0001>
module attributes {stable_mosaic.version = 11 : i64} {
  func.func @_matmul_kernel(%arg0: i32, %arg1: i32, %arg2: i32, %arg3: memref<16x32xbf16, #tpu.memory_space<vmem>>, %arg4: memref<32x96xbf16, #tpu.memory_space<vmem>>, %arg5: memref<16x96xbf16, #tpu.memory_space<vmem>>, %arg6: memref<16x96xf32, #tpu.memory_space<vmem>>) attributes {dimension_semantics = [#tpu.dimension_semantics<parallel>, #tpu.dimension_semantics<parallel>, #tpu.dimension_semantics<arbitrary>], iteration_bounds = array<i64: 1, 1, 1>, scalar_prefetch = 0 : i64, scratch_operands = 1 : i64, tpu.core_type = #tpu.core_type<tc>, window_params = [{transform_indices = @transform_0, window_bounds = array<i64: 16, 32>}, {transform_indices = @transform_1, window_bounds = array<i64: 32, 96>}, {transform_indices = @transform_2, window_bounds = array<i64: 16, 96>}]} {
    %c0_i32 = arith.constant 0 : i32
    %0 = arith.cmpi eq, %arg2, %c0_i32 : i32
    %1 = arith.extui %0 : i1 to i32
    %c0_i32_0 = arith.constant 0 : i32
    %2 = arith.cmpi ne, %1, %c0_i32_0 : i32
    scf.if %2 {
      %cst_10 = arith.constant 0.000000e+00 : f32
      %12 = vector.broadcast %cst_10 : f32 to vector<16x96xf32>
      %c0_11 = arith.constant 0 : index
      %c0_12 = arith.constant 0 : index
      %13 = vector.load %arg6[%c0_11, %c0_12] : memref<16x96xf32, #tpu.memory_space<vmem>>, vector<16x96xf32>
      tpu.vector_store %arg6[%c0_11, %c0_12], %12 {strides = array<i32>} : memref<16x96xf32, #tpu.memory_space<vmem>>, vector<16x96xf32>,
    } else {
    }
    %c0 = arith.constant 0 : index
    %c0_1 = arith.constant 0 : index
    %3 = vector.load %arg6[%c0, %c0_1] : memref<16x96xf32, #tpu.memory_space<vmem>>, vector<16x96xf32>
    %c0_2 = arith.constant 0 : index
    %c0_3 = arith.constant 0 : index
    %4 = vector.load %arg3[%c0_2, %c0_3] : memref<16x32xbf16, #tpu.memory_space<vmem>>, vector<16x32xbf16>
    %c0_4 = arith.constant 0 : index
    %c0_5 = arith.constant 0 : index
    %5 = vector.load %arg4[%c0_4, %c0_5] : memref<32x96xbf16, #tpu.memory_space<vmem>>, vector<32x96xbf16>
    %cst = arith.constant dense<0.000000e+00> : vector<16x96xf32>
    %6 = tpu.matmul %4, %5, %cst {dimension_numbers = #tpu.dot_dimension_numbers<[1], [0], [0], [1], [0, 0, 1, 1], [], []>} : vector<16x32xbf16>, vector<32x96xbf16>, vector<16x96xf32> -> vector<16x96xf32>
    %7 = arith.addf %3, %6 : vector<16x96xf32>
    %c0_6 = arith.constant 0 : index
    %c0_7 = arith.constant 0 : index
    %8 = vector.load %arg6[%c0_6, %c0_7] : memref<16x96xf32, #tpu.memory_space<vmem>>, vector<16x96xf32>
    tpu.vector_store %arg6[%c0_6, %c0_7], %7 {strides = array<i32>} : memref<16x96xf32, #tpu.memory_space<vmem>>, vector<16x96xf32>,
    %c0_i32_8 = arith.constant 0 : i32
    %9 = arith.cmpi eq, %arg2, %c0_i32_8 : i32
    %10 = arith.extui %9 : i1 to i32
    %c0_i32_9 = arith.constant 0 : i32
    %11 = arith.cmpi ne, %10, %c0_i32_9 : i32
    scf.if %11 {
      %c0_10 = arith.constant 0 : index
      %c0_11 = arith.constant 0 : index
      %12 = vector.load %arg6[%c0_10, %c0_11] : memref<16x96xf32, #tpu.memory_space<vmem>>, vector<16x96xf32>
      %13 = arith.truncf %12 : vector<16x96xf32> to vector<16x96xbf16>
      %c0_12 = arith.constant 0 : index
      %c0_13 = arith.constant 0 : index
      %14 = vector.load %arg5[%c0_12, %c0_13] : memref<16x96xbf16, #tpu.memory_space<vmem>>, vector<16x96xbf16>
      tpu.vector_store %arg5[%c0_12, %c0_13], %13 {strides = array<i32>} : memref<16x96xbf16, #tpu.memory_space<vmem>>, vector<16x96xbf16>,
    } else {
    }
    return
  }
  func.func @transform_0(%arg0: i32, %arg1: i32, %arg2: i32) -> (i32, i32) {
    %c0_i32 = arith.constant 0 : i32
    return %arg0, %arg2 : i32, i32
  }
  func.func @transform_1(%arg0: i32, %arg1: i32, %arg2: i32) -> (i32, i32) {
    %c0_i32 = arith.constant 0 : i32
    return %arg2, %arg1 : i32, i32
  }
  func.func @transform_2(%arg0: i32, %arg1: i32, %arg2: i32) -> (i32, i32) {
    %c0_i32 = arith.constant 0 : i32
    return %arg0, %arg1 : i32, i32
  }
}

module attributes {stable_mosaic.version = 11 : i64} {
  func.func @_flash_attn_kernel(%arg0: i32, %arg1: i32, %arg2: i32, %arg3: i32, %arg4: memref<1x8x8x4xbf16, #tpu.memory_space<vmem>>, %arg5: memref<1x8x8x4xbf16, #tpu.memory_space<vmem>>, %arg6: memref<1x8x8x4xbf16, #tpu.memory_space<vmem>>, %arg7: memref<1x8x32xbf16, #tpu.memory_space<vmem>>, %arg8: memref<8x8x1xf32, #tpu.memory_space<vmem>>, %arg9: memref<8x8x1xf32, #tpu.memory_space<vmem>>, %arg10: memref<8x8x4xf32, #tpu.memory_space<vmem>>) attributes {dimension_semantics = [#tpu.dimension_semantics<parallel>, #tpu.dimension_semantics<parallel>, #tpu.dimension_semantics<parallel>, #tpu.dimension_semantics<arbitrary>], iteration_bounds = array<i64: 2, 1, 1, 1>, scalar_prefetch = 0 : i64, scratch_operands = 3 : i64, tpu.core_type = #tpu.core_type<tc>, window_params = [{transform_indices = @transform_0, window_bounds = array<i64: 1, 8, 8, 4>}, {transform_indices = @transform_1, window_bounds = array<i64: 1, 8, 8, 4>}, {transform_indices = @transform_2, window_bounds = array<i64: 1, 8, 8, 4>}, {transform_indices = @transform_3, window_bounds = array<i64: 1, 8, 32>}]} {
    %c0_i32 = arith.constant 0 : i32
    %0 = arith.cmpi eq, %arg3, %c0_i32 : i32
    %1 = arith.extui %0 : i1 to i32
    %c0_i32_0 = arith.constant 0 : i32
    %2 = arith.cmpi ne, %1, %c0_i32_0 : i32
    scf.if %2 {
      %cst_35 = arith.constant 0xFF800000 : f32
      %36 = vector.broadcast %cst_35 : f32 to vector<8x8x1xf32>
      %c0_36 = arith.constant 0 : index
      %c0_37 = arith.constant 0 : index
      %c0_38 = arith.constant 0 : index
      %37 = vector.load %arg8[%c0_36, %c0_37, %c0_38] : memref<8x8x1xf32, #tpu.memory_space<vmem>>, vector<8x8x1xf32>
      tpu.vector_store %arg8[%c0_36, %c0_37, %c0_38], %36 {strides = array<i32>} : memref<8x8x1xf32, #tpu.memory_space<vmem>>, vector<8x8x1xf32>,
      %cst_39 = arith.constant 0.000000e+00 : f32
      %38 = vector.broadcast %cst_39 : f32 to vector<8x8x1xf32>
      %c0_40 = arith.constant 0 : index
      %c0_41 = arith.constant 0 : index
      %c0_42 = arith.constant 0 : index
      %39 = vector.load %arg9[%c0_40, %c0_41, %c0_42] : memref<8x8x1xf32, #tpu.memory_space<vmem>>, vector<8x8x1xf32>
      tpu.vector_store %arg9[%c0_40, %c0_41, %c0_42], %38 {strides = array<i32>} : memref<8x8x1xf32, #tpu.memory_space<vmem>>, vector<8x8x1xf32>,
      %cst_43 = arith.constant 0.000000e+00 : f32
      %40 = vector.broadcast %cst_43 : f32 to vector<8x8x4xf32>
      %c0_44 = arith.constant 0 : index
      %c0_45 = arith.constant 0 : index
      %c0_46 = arith.constant 0 : index
      %41 = vector.load %arg10[%c0_44, %c0_45, %c0_46] : memref<8x8x4xf32, #tpu.memory_space<vmem>>, vector<8x8x4xf32>
      tpu.vector_store %arg10[%c0_44, %c0_45, %c0_46], %40 {strides = array<i32>} : memref<8x8x4xf32, #tpu.memory_space<vmem>>, vector<8x8x4xf32>,
    } else {
    }
    %c0 = arith.constant 0 : index
    %c0_1 = arith.constant 0 : index
    %c0_2 = arith.constant 0 : index
    %c0_3 = arith.constant 0 : index
    %3 = vector.load %arg4[%c0, %c0_1, %c0_2, %c0_3] : memref<1x8x8x4xbf16, #tpu.memory_space<vmem>>, vector<1x8x8x4xbf16>
    %4 = vector.shape_cast %3 : vector<1x8x8x4xbf16> to vector<8x8x4xbf16>
    %c0_4 = arith.constant 0 : index
    %c0_5 = arith.constant 0 : index
    %c0_6 = arith.constant 0 : index
    %c0_7 = arith.constant 0 : index
    %5 = vector.load %arg5[%c0_4, %c0_5, %c0_6, %c0_7] : memref<1x8x8x4xbf16, #tpu.memory_space<vmem>>, vector<1x8x8x4xbf16>
    %6 = vector.shape_cast %5 : vector<1x8x8x4xbf16> to vector<8x8x4xbf16>
    "tpu.trace_start"() <{level = 10 : i32, message = "hqd,hkd->hqk"}> : () -> ()
    %cst = arith.constant dense<0.000000e+00> : vector<8x8x8xf32>
    %7 = tpu.matmul %4, %6, %cst {dimension_numbers = #tpu.dot_dimension_numbers<[2], [2], [1], [1], [0, 0, 0, 1, 1, 1], [0], [0]>} : vector<8x8x4xbf16>, vector<8x8x4xbf16>, vector<8x8x8xf32> -> vector<8x8x8xf32>
    "tpu.trace_stop"() : () -> ()
    %c0_8 = arith.constant 0 : index
    %c0_9 = arith.constant 0 : index
    %c0_10 = arith.constant 0 : index
    %8 = vector.load %arg8[%c0_8, %c0_9, %c0_10] : memref<8x8x1xf32, #tpu.memory_space<vmem>>, vector<8x8x1xf32>
    %cst_11 = arith.constant dense<0xFF800000> : vector<8x8xf32>
    %9 = vector.multi_reduction <maximumf>, %7, %cst_11 [2] : vector<8x8x8xf32> to vector<8x8xf32>
    %10 = vector.shape_cast %9 : vector<8x8xf32> to vector<8x8x1xf32>
    %11 = arith.maximumf %8, %10 : vector<8x8x1xf32>
    %12 = arith.subf %8, %11 : vector<8x8x1xf32>
    %13 = math.exp %12 : vector<8x8x1xf32>
    %14 = vector.broadcast %11 : vector<8x8x1xf32> to vector<8x8x8xf32>
    %15 = arith.subf %7, %14 : vector<8x8x8xf32>
    %16 = math.exp %15 : vector<8x8x8xf32>
    %c0_12 = arith.constant 0 : index
    %c0_13 = arith.constant 0 : index
    %c0_14 = arith.constant 0 : index
    %17 = vector.load %arg9[%c0_12, %c0_13, %c0_14] : memref<8x8x1xf32, #tpu.memory_space<vmem>>, vector<8x8x1xf32>
    %18 = arith.mulf %13, %17 : vector<8x8x1xf32>
    %cst_15 = arith.constant dense<0.000000e+00> : vector<8x8xf32>
    %19 = vector.multi_reduction <add>, %16, %cst_15 [2] : vector<8x8x8xf32> to vector<8x8xf32>
    %20 = vector.shape_cast %19 : vector<8x8xf32> to vector<8x8x1xf32>
    %21 = arith.addf %18, %20 : vector<8x8x1xf32>
    %c0_16 = arith.constant 0 : index
    %c0_17 = arith.constant 0 : index
    %c0_18 = arith.constant 0 : index
    %22 = vector.load %arg9[%c0_16, %c0_17, %c0_18] : memref<8x8x1xf32, #tpu.memory_space<vmem>>, vector<8x8x1xf32>
    tpu.vector_store %arg9[%c0_16, %c0_17, %c0_18], %21 {strides = array<i32>} : memref<8x8x1xf32, #tpu.memory_space<vmem>>, vector<8x8x1xf32>,
    %c0_19 = arith.constant 0 : index
    %c0_20 = arith.constant 0 : index
    %c0_21 = arith.constant 0 : index
    %23 = vector.load %arg10[%c0_19, %c0_20, %c0_21] : memref<8x8x4xf32, #tpu.memory_space<vmem>>, vector<8x8x4xf32>
    %24 = vector.broadcast %13 : vector<8x8x1xf32> to vector<8x8x4xf32>
    %25 = arith.mulf %24, %23 : vector<8x8x4xf32>
    %26 = arith.truncf %16 : vector<8x8x8xf32> to vector<8x8x8xbf16>
    %c0_22 = arith.constant 0 : index
    %c0_23 = arith.constant 0 : index
    %c0_24 = arith.constant 0 : index
    %c0_25 = arith.constant 0 : index
    %27 = vector.load %arg6[%c0_22, %c0_23, %c0_24, %c0_25] : memref<1x8x8x4xbf16, #tpu.memory_space<vmem>>, vector<1x8x8x4xbf16>
    %28 = vector.shape_cast %27 : vector<1x8x8x4xbf16> to vector<8x8x4xbf16>
    "tpu.trace_start"() <{level = 10 : i32, message = "hqk,hkd->hqd"}> : () -> ()
    %cst_26 = arith.constant dense<0.000000e+00> : vector<8x8x4xf32>
    %29 = tpu.matmul %26, %28, %cst_26 {dimension_numbers = #tpu.dot_dimension_numbers<[2], [1], [1], [2], [0, 0, 0, 1, 1, 2], [0], [0]>} : vector<8x8x8xbf16>, vector<8x8x4xbf16>, vector<8x8x4xf32> -> vector<8x8x4xf32>
    "tpu.trace_stop"() : () -> ()
    %30 = arith.addf %25, %29 : vector<8x8x4xf32>
    %c0_27 = arith.constant 0 : index
    %c0_28 = arith.constant 0 : index
    %c0_29 = arith.constant 0 : index
    %31 = vector.load %arg10[%c0_27, %c0_28, %c0_29] : memref<8x8x4xf32, #tpu.memory_space<vmem>>, vector<8x8x4xf32>
    tpu.vector_store %arg10[%c0_27, %c0_28, %c0_29], %30 {strides = array<i32>} : memref<8x8x4xf32, #tpu.memory_space<vmem>>, vector<8x8x4xf32>,
    %c0_30 = arith.constant 0 : index
    %c0_31 = arith.constant 0 : index
    %c0_32 = arith.constant 0 : index
    %32 = vector.load %arg8[%c0_30, %c0_31, %c0_32] : memref<8x8x1xf32, #tpu.memory_space<vmem>>, vector<8x8x1xf32>
    tpu.vector_store %arg8[%c0_30, %c0_31, %c0_32], %11 {strides = array<i32>} : memref<8x8x1xf32, #tpu.memory_space<vmem>>, vector<8x8x1xf32>,
    %c0_i32_33 = arith.constant 0 : i32
    %33 = arith.cmpi eq, %arg3, %c0_i32_33 : i32
    %34 = arith.extui %33 : i1 to i32
    %c0_i32_34 = arith.constant 0 : i32
    %35 = arith.cmpi ne, %34, %c0_i32_34 : i32
    scf.if %35 {
      %c0_35 = arith.constant 0 : index
      %c0_36 = arith.constant 0 : index
      %c0_37 = arith.constant 0 : index
      %36 = vector.load %arg10[%c0_35, %c0_36, %c0_37] : memref<8x8x4xf32, #tpu.memory_space<vmem>>, vector<8x8x4xf32>
      %c0_38 = arith.constant 0 : index
      %c0_39 = arith.constant 0 : index
      %c0_40 = arith.constant 0 : index
      %37 = vector.load %arg9[%c0_38, %c0_39, %c0_40] : memref<8x8x1xf32, #tpu.memory_space<vmem>>, vector<8x8x1xf32>
      %38 = vector.broadcast %37 : vector<8x8x1xf32> to vector<8x8x4xf32>
      %39 = arith.divf %36, %38 : vector<8x8x4xf32>
      %40 = arith.truncf %39 : vector<8x8x4xf32> to vector<8x8x4xbf16>
      %41 = vector.extract_strided_slice %40 {offsets = [0, 0, 0], sizes = [1, 8, 4], strides = [1, 1, 1]} : vector<8x8x4xbf16> to vector<1x8x4xbf16>
      %42 = vector.shape_cast %41 : vector<1x8x4xbf16> to vector<8x4xbf16>
      %c0_41 = arith.constant 0 : index
      %c0_42 = arith.constant 0 : index
      %c0_43 = arith.constant 0 : index
      %43 = vector.load %arg7[%c0_41, %c0_42, %c0_43] : memref<1x8x32xbf16, #tpu.memory_space<vmem>>, vector<1x8x4xbf16>
      %44 = vector.shape_cast %43 : vector<1x8x4xbf16> to vector<8x4xbf16>
      %45 = vector.shape_cast %42 : vector<8x4xbf16> to vector<1x8x4xbf16>
      tpu.vector_store %arg7[%c0_41, %c0_42, %c0_43], %45 {strides = array<i32>} : memref<1x8x32xbf16, #tpu.memory_space<vmem>>, vector<1x8x4xbf16>,
      %46 = vector.extract_strided_slice %40 {offsets = [1, 0, 0], sizes = [1, 8, 4], strides = [1, 1, 1]} : vector<8x8x4xbf16> to vector<1x8x4xbf16>
      %47 = vector.shape_cast %46 : vector<1x8x4xbf16> to vector<8x4xbf16>
      %c0_44 = arith.constant 0 : index
      %c0_45 = arith.constant 0 : index
      %c4 = arith.constant 4 : index
      %48 = vector.load %arg7[%c0_44, %c0_45, %c4] : memref<1x8x32xbf16, #tpu.memory_space<vmem>>, vector<1x8x4xbf16>
      %49 = vector.shape_cast %48 : vector<1x8x4xbf16> to vector<8x4xbf16>
      %50 = vector.shape_cast %47 : vector<8x4xbf16> to vector<1x8x4xbf16>
      tpu.vector_store %arg7[%c0_44, %c0_45, %c4], %50 {strides = array<i32>} : memref<1x8x32xbf16, #tpu.memory_space<vmem>>, vector<1x8x4xbf16>,
      %51 = vector.extract_strided_slice %40 {offsets = [2, 0, 0], sizes = [1, 8, 4], strides = [1, 1, 1]} : vector<8x8x4xbf16> to vector<1x8x4xbf16>
      %52 = vector.shape_cast %51 : vector<1x8x4xbf16> to vector<8x4xbf16>
      %c0_46 = arith.constant 0 : index
      %c0_47 = arith.constant 0 : index
      %c8 = arith.constant 8 : index
      %53 = vector.load %arg7[%c0_46, %c0_47, %c8] : memref<1x8x32xbf16, #tpu.memory_space<vmem>>, vector<1x8x4xbf16>
      %54 = vector.shape_cast %53 : vector<1x8x4xbf16> to vector<8x4xbf16>
      %55 = vector.shape_cast %52 : vector<8x4xbf16> to vector<1x8x4xbf16>
      tpu.vector_store %arg7[%c0_46, %c0_47, %c8], %55 {strides = array<i32>} : memref<1x8x32xbf16, #tpu.memory_space<vmem>>, vector<1x8x4xbf16>,
      %56 = vector.extract_strided_slice %40 {offsets = [3, 0, 0], sizes = [1, 8, 4], strides = [1, 1, 1]} : vector<8x8x4xbf16> to vector<1x8x4xbf16>
      %57 = vector.shape_cast %56 : vector<1x8x4xbf16> to vector<8x4xbf16>
      %c0_48 = arith.constant 0 : index
      %c0_49 = arith.constant 0 : index
      %c12 = arith.constant 12 : index
      %58 = vector.load %arg7[%c0_48, %c0_49, %c12] : memref<1x8x32xbf16, #tpu.memory_space<vmem>>, vector<1x8x4xbf16>
      %59 = vector.shape_cast %58 : vector<1x8x4xbf16> to vector<8x4xbf16>
      %60 = vector.shape_cast %57 : vector<8x4xbf16> to vector<1x8x4xbf16>
      tpu.vector_store %arg7[%c0_48, %c0_49, %c12], %60 {strides = array<i32>} : memref<1x8x32xbf16, #tpu.memory_space<vmem>>, vector<1x8x4xbf16>,
      %61 = vector.extract_strided_slice %40 {offsets = [4, 0, 0], sizes = [1, 8, 4], strides = [1, 1, 1]} : vector<8x8x4xbf16> to vector<1x8x4xbf16>
      %62 = vector.shape_cast %61 : vector<1x8x4xbf16> to vector<8x4xbf16>
      %c0_50 = arith.constant 0 : index
      %c0_51 = arith.constant 0 : index
      %c16 = arith.constant 16 : index
      %63 = vector.load %arg7[%c0_50, %c0_51, %c16] : memref<1x8x32xbf16, #tpu.memory_space<vmem>>, vector<1x8x4xbf16>
      %64 = vector.shape_cast %63 : vector<1x8x4xbf16> to vector<8x4xbf16>
      %65 = vector.shape_cast %62 : vector<8x4xbf16> to vector<1x8x4xbf16>
      tpu.vector_store %arg7[%c0_50, %c0_51, %c16], %65 {strides = array<i32>} : memref<1x8x32xbf16, #tpu.memory_space<vmem>>, vector<1x8x4xbf16>,
      %66 = vector.extract_strided_slice %40 {offsets = [5, 0, 0], sizes = [1, 8, 4], strides = [1, 1, 1]} : vector<8x8x4xbf16> to vector<1x8x4xbf16>
      %67 = vector.shape_cast %66 : vector<1x8x4xbf16> to vector<8x4xbf16>
      %c0_52 = arith.constant 0 : index
      %c0_53 = arith.constant 0 : index
      %c20 = arith.constant 20 : index
      %68 = vector.load %arg7[%c0_52, %c0_53, %c20] : memref<1x8x32xbf16, #tpu.memory_space<vmem>>, vector<1x8x4xbf16>
      %69 = vector.shape_cast %68 : vector<1x8x4xbf16> to vector<8x4xbf16>
      %70 = vector.shape_cast %67 : vector<8x4xbf16> to vector<1x8x4xbf16>
      tpu.vector_store %arg7[%c0_52, %c0_53, %c20], %70 {strides = array<i32>} : memref<1x8x32xbf16, #tpu.memory_space<vmem>>, vector<1x8x4xbf16>,
      %71 = vector.extract_strided_slice %40 {offsets = [6, 0, 0], sizes = [1, 8, 4], strides = [1, 1, 1]} : vector<8x8x4xbf16> to vector<1x8x4xbf16>
      %72 = vector.shape_cast %71 : vector<1x8x4xbf16> to vector<8x4xbf16>
      %c0_54 = arith.constant 0 : index
      %c0_55 = arith.constant 0 : index
      %c24 = arith.constant 24 : index
      %73 = vector.load %arg7[%c0_54, %c0_55, %c24] : memref<1x8x32xbf16, #tpu.memory_space<vmem>>, vector<1x8x4xbf16>
      %74 = vector.shape_cast %73 : vector<1x8x4xbf16> to vector<8x4xbf16>
      %75 = vector.shape_cast %72 : vector<8x4xbf16> to vector<1x8x4xbf16>
      tpu.vector_store %arg7[%c0_54, %c0_55, %c24], %75 {strides = array<i32>} : memref<1x8x32xbf16, #tpu.memory_space<vmem>>, vector<1x8x4xbf16>,
      %76 = vector.extract_strided_slice %40 {offsets = [7, 0, 0], sizes = [1, 8, 4], strides = [1, 1, 1]} : vector<8x8x4xbf16> to vector<1x8x4xbf16>
      %77 = vector.shape_cast %76 : vector<1x8x4xbf16> to vector<8x4xbf16>
      %c0_56 = arith.constant 0 : index
      %c0_57 = arith.constant 0 : index
      %c28 = arith.constant 28 : index
      %78 = vector.load %arg7[%c0_56, %c0_57, %c28] : memref<1x8x32xbf16, #tpu.memory_space<vmem>>, vector<1x8x4xbf16>
      %79 = vector.shape_cast %78 : vector<1x8x4xbf16> to vector<8x4xbf16>
      %80 = vector.shape_cast %77 : vector<8x4xbf16> to vector<1x8x4xbf16>
      tpu.vector_store %arg7[%c0_56, %c0_57, %c28], %80 {strides = array<i32>} : memref<1x8x32xbf16, #tpu.memory_space<vmem>>, vector<1x8x4xbf16>,
    } else {
    }
    return
  }
  func.func @transform_0(%arg0: i32, %arg1: i32, %arg2: i32, %arg3: i32) -> (i32, i32, i32, i32) {
    %c0_i32 = arith.constant 0 : i32
    %c0_i32_0 = arith.constant 0 : i32
    return %arg0, %arg1, %arg2, %c0_i32 : i32, i32, i32, i32
  }
  func.func @transform_1(%arg0: i32, %arg1: i32, %arg2: i32, %arg3: i32) -> (i32, i32, i32, i32) {
    %c0_i32 = arith.constant 0 : i32
    %c0_i32_0 = arith.constant 0 : i32
    return %arg0, %arg1, %arg3, %c0_i32 : i32, i32, i32, i32
  }
  func.func @transform_2(%arg0: i32, %arg1: i32, %arg2: i32, %arg3: i32) -> (i32, i32, i32, i32) {
    %c0_i32 = arith.constant 0 : i32
    %c0_i32_0 = arith.constant 0 : i32
    return %arg0, %arg1, %arg3, %c0_i32 : i32, i32, i32, i32
  }
  func.func @transform_3(%arg0: i32, %arg1: i32, %arg2: i32, %arg3: i32) -> (i32, i32, i32) {
    %c0_i32 = arith.constant 0 : i32
    return %arg0, %arg2, %arg1 : i32, i32, i32
  }
}

module attributes {stable_mosaic.version = 11 : i64} {
  func.func @_matmul_bias_kernel(%arg0: i32, %arg1: i32, %arg2: i32, %arg3: memref<16x32xbf16, #tpu.memory_space<vmem>>, %arg4: memref<32x32xbf16, #tpu.memory_space<vmem>>, %arg5: memref<1x32xf32, #tpu.memory_space<vmem>>, %arg6: memref<16x32xf32, #tpu.memory_space<vmem>>, %arg7: memref<16x32xf32, #tpu.memory_space<vmem>>) attributes {dimension_semantics = [#tpu.dimension_semantics<parallel>, #tpu.dimension_semantics<parallel>, #tpu.dimension_semantics<arbitrary>], iteration_bounds = array<i64: 1, 1, 1>, scalar_prefetch = 0 : i64, scratch_operands = 1 : i64, tpu.core_type = #tpu.core_type<tc>, window_params = [{transform_indices = @transform_0, window_bounds = array<i64: 16, 32>}, {transform_indices = @transform_1, window_bounds = array<i64: 32, 32>}, {transform_indices = @transform_2, window_bounds = array<i64: 1, 32>}, {transform_indices = @transform_3, window_bounds = array<i64: 16, 32>}]} {
    %c0_i32 = arith.constant 0 : i32
    %0 = arith.cmpi eq, %arg2, %c0_i32 : i32
    %1 = arith.extui %0 : i1 to i32
    %c0_i32_0 = arith.constant 0 : i32
    %2 = arith.cmpi ne, %1, %c0_i32_0 : i32
    scf.if %2 {
      %cst_10 = arith.constant 0.000000e+00 : f32
      %12 = vector.broadcast %cst_10 : f32 to vector<16x32xf32>
      %c0_11 = arith.constant 0 : index
      %c0_12 = arith.constant 0 : index
      %13 = vector.load %arg7[%c0_11, %c0_12] : memref<16x32xf32, #tpu.memory_space<vmem>>, vector<16x32xf32>
      tpu.vector_store %arg7[%c0_11, %c0_12], %12 {strides = array<i32>} : memref<16x32xf32, #tpu.memory_space<vmem>>, vector<16x32xf32>,
    } else {
    }
    %c0 = arith.constant 0 : index
    %c0_1 = arith.constant 0 : index
    %3 = vector.load %arg7[%c0, %c0_1] : memref<16x32xf32, #tpu.memory_space<vmem>>, vector<16x32xf32>
    %c0_2 = arith.constant 0 : index
    %c0_3 = arith.constant 0 : index
    %4 = vector.load %arg3[%c0_2, %c0_3] : memref<16x32xbf16, #tpu.memory_space<vmem>>, vector<16x32xbf16>
    %c0_4 = arith.constant 0 : index
    %c0_5 = arith.constant 0 : index
    %5 = vector.load %arg4[%c0_4, %c0_5] : memref<32x32xbf16, #tpu.memory_space<vmem>>, vector<32x32xbf16>
    %cst = arith.constant dense<0.000000e+00> : vector<16x32xf32>
    %6 = tpu.matmul %4, %5, %cst {dimension_numbers = #tpu.dot_dimension_numbers<[1], [0], [0], [1], [0, 0, 1, 1], [], []>} : vector<16x32xbf16>, vector<32x32xbf16>, vector<16x32xf32> -> vector<16x32xf32>
    %7 = arith.addf %3, %6 : vector<16x32xf32>
    %c0_6 = arith.constant 0 : index
    %c0_7 = arith.constant 0 : index
    %8 = vector.load %arg7[%c0_6, %c0_7] : memref<16x32xf32, #tpu.memory_space<vmem>>, vector<16x32xf32>
    tpu.vector_store %arg7[%c0_6, %c0_7], %7 {strides = array<i32>} : memref<16x32xf32, #tpu.memory_space<vmem>>, vector<16x32xf32>,
    %c0_i32_8 = arith.constant 0 : i32
    %9 = arith.cmpi eq, %arg2, %c0_i32_8 : i32
    %10 = arith.extui %9 : i1 to i32
    %c0_i32_9 = arith.constant 0 : i32
    %11 = arith.cmpi ne, %10, %c0_i32_9 : i32
    scf.if %11 {
      %c0_10 = arith.constant 0 : index
      %c0_11 = arith.constant 0 : index
      %12 = vector.load %arg7[%c0_10, %c0_11] : memref<16x32xf32, #tpu.memory_space<vmem>>, vector<16x32xf32>
      %c0_12 = arith.constant 0 : index
      %c0_13 = arith.constant 0 : index
      %13 = vector.load %arg5[%c0_12, %c0_13] : memref<1x32xf32, #tpu.memory_space<vmem>>, vector<1x32xf32>
      %14 = vector.broadcast %13 : vector<1x32xf32> to vector<16x32xf32>
      %15 = arith.addf %12, %14 : vector<16x32xf32>
      %c0_14 = arith.constant 0 : index
      %c0_15 = arith.constant 0 : index
      %16 = vector.load %arg6[%c0_14, %c0_15] : memref<16x32xf32, #tpu.memory_space<vmem>>, vector<16x32xf32>
      tpu.vector_store %arg6[%c0_14, %c0_15], %15 {strides = array<i32>} : memref<16x32xf32, #tpu.memory_space<vmem>>, vector<16x32xf32>,
    } else {
    }
    return
  }
  func.func @transform_0(%arg0: i32, %arg1: i32, %arg2: i32) -> (i32, i32) {
    %c0_i32 = arith.constant 0 : i32
    return %arg0, %arg2 : i32, i32
  }
  func.func @transform_1(%arg0: i32, %arg1: i32, %arg2: i32) -> (i32, i32) {
    %c0_i32 = arith.constant 0 : i32
    return %arg2, %arg1 : i32, i32
  }
  func.func @transform_2(%arg0: i32, %arg1: i32, %arg2: i32) -> (i32, i32) {
    %c0_i32 = arith.constant 0 : i32
    %c0_i32_0 = arith.constant 0 : i32
    return %c0_i32, %arg1 : i32, i32
  }
  func.func @transform_3(%arg0: i32, %arg1: i32, %arg2: i32) -> (i32, i32) {
    %c0_i32 = arith.constant 0 : i32
    return %arg0, %arg1 : i32, i32
  }
}

</mosaic_0001>

<llo_original>
// kernel: memory_efficient_attention.3
$region0: #{memory_efficient_attention.3}
  #allocation0 [shape = 'u32[]', space=smem, size = 0x4, offset = 0x4, fixed_abs, tag = 'smem constant byte address 0x4 - core index']
  #allocation1 [shape = 'u32[144,128]{1,0:T(1,128)}', space=vmem, size = 0x12000, scoped, tag = 'internal scratch']
  #allocation2 [shape = 'f32[16,96]{1,0:T(8,128)}', space=vmem, size = 0x2000, scoped, tag = 'scratch operand']
  %s0 = inlined_call_operand.vmem [shape: bf16[16,32], index: 0, kind: input, shape index: {}]
  %s1 = inlined_call_operand.vmem [shape: bf16[32,96], index: 1, kind: input, shape index: {}]
  %s2 = inlined_call_operand.vmem [shape: bf16[16,96], index: 2, kind: output, shape index: {}]
  %s3 = sld [smem:[#allocation0]]
  $region26: #{memory_efficient_attention.3} parent=0
    _
  %s5 = ssub.s32 1, %s3
  %s6 = scalar_select 0, %s5, %s3
  // Predicated region
  $region2: #{memory_efficient_attention.3} parent=0 // pred_check
    _
  $region3: #{memory_efficient_attention.3} parent=0 // pred_check_branch
    %8 = sbr.rel (0) target = $region5
  $region4: #{memory_efficient_attention.3} parent=0 // pred_region
    _
  $region5: #{memory_efficient_attention.3} parent=0 // pred_fallthru
    _
  // Predicated region
  $region6: #{memory_efficient_attention.3} parent=0 // pred_check
    _
  $region7: #{memory_efficient_attention.3} parent=0 // pred_check_branch
    %10 = sbr.rel (0) target = $region9
  $region8: #{memory_efficient_attention.3} parent=0 // pred_region
    _
  $region9: #{memory_efficient_attention.3} parent=0 // pred_fallthru
    _
  %p12 = scmp.eq.s32.totalorder 0, 0
  // Predicated region
  $region10: #{memory_efficient_attention.3} parent=0 // pred_check
    %p13 = pneg %p12
  $region11: #{memory_efficient_attention.3} parent=0 // pred_check_branch
    %15 = sbr.rel (%p13) target = $region13
  $region12: #{memory_efficient_attention.3} parent=0 // pred_region
    %vm16 = vcmask 785408
    %17 = vst.msk [vmem:[#allocation2] sm:$0xff] %vm16, 0.0
    %18 = vst.msk [vmem:[#allocation2 + $0x8] sm:$0xff] %vm16, 0.0
  $region13: #{memory_efficient_attention.3} parent=0 // pred_fallthru
    _
  %v19 = vld [vmem:[#allocation2] sm:$0xff]
  %v20 = vld [vmem:[#allocation2 + $0x8] sm:$0xff]
  %v21 = vld [vmem:[%s0] sm:$0xf]
  %v22 = vld [vmem:[%s0 + $0x4] sm:$0xf]
  %v23 = vld [vmem:[%s1] sm:$0xf]
  %v24 = vld [vmem:[%s1 + $0x4] sm:$0xf]
  %v25 = vld [vmem:[%s1 + $0x8] sm:$0xf]
  %v26 = vld [vmem:[%s1 + $0xc] sm:$0xf]
  %v29 = vunpack.c.l.b16 %v21
  %v30 = vunpack.c.l.b16 %v22
  %v31 = vpack.c.b16 %v30, %v29
  %v36 = vunpack.c.l.b16 %v23
  %v37 = vunpack.c.l.b16 %v24
  %v38 = vunpack.c.l.b16 %v25
  %v39 = vunpack.c.l.b16 %v26
  %v40 = vpack.c.b16 %v37, %v36
  %v41 = vpack.c.b16 %v39, %v38
  %vm44 = vcmask 261120
  %v46 = vsel %vm44, %v31, 0
  %48 = vmatprep.subr.bf16.mxu0 0
  %49 = vmatpush1.bf16.msra.mxu0 %v40
  %50 = vmatprep.subr.bf16.mxu0 0
  %51 = vmatpush1.bf16.msra.mxu0 %v41
  %52 = vmatprep.subr.bf16.mxu0 0
  %53 = vmatpush1.bf16.msra.mxu0 0
  %54 = vmatprep.subr.bf16.mxu0 0
  %55 = vmatpush1.bf16.msra.mxu0 0
  %56 = vmatprep.subr.bf16.mxu0 0
  %57 = vmatpush1.bf16.msra.mxu0 0
  %58 = vmatprep.subr.bf16.mxu0 0
  %59 = vmatpush1.bf16.msra.mxu0 0
  %60 = vmatprep.subr.bf16.mxu0 0
  %61 = vmatpush1.bf16.msra.mxu0 0
  %62 = vmatprep.subr.bf16.mxu0 0
  %63 = vmatpush1.bf16.msra.mxu0 0
  %64 = vmatprep.subr.bf16.mxu0 0
  %65 = vmatpush1.bf16.msra.mxu0 0
  %66 = vmatprep.subr.bf16.mxu0 0
  %67 = vmatpush1.bf16.msra.mxu0 0
  %68 = vmatprep.subr.bf16.mxu0 0
  %69 = vmatpush1.bf16.msra.mxu0 0
  %70 = vmatprep.subr.bf16.mxu0 0
  %71 = vmatpush1.bf16.msra.mxu0 0
  %72 = vmatprep.subr.bf16.mxu0 0
  %73 = vmatpush1.bf16.msra.mxu0 0
  %74 = vmatprep.subr.bf16.mxu0 0
  %75 = vmatpush1.bf16.msra.mxu0 0
  %76 = vmatprep.subr.bf16.mxu0 0
  %77 = vmatpush1.bf16.msra.mxu0 0
  %78 = vmatprep.subr.bf16.mxu0 0
  %79 = vmatpush1.bf16.msra.mxu0 0
  %80 = vmatprep.mubr.bf16.mxu0 0
  %81 = vmatmul.mubr.bf16.gmra.mrb[0].mxu0 %v46
  %v82 = vpop.f32.mrb[0].mxu0
  %v83 = vadd.f32 0.0, %v82
  %v84 = vpop.f32.mrb[0].mxu0
  %v85 = vpop.f32.mrb[0].mxu0
  %v86 = vadd.f32 0.0, %v85
  %v87 = vpop.f32.mrb[0].mxu0
  %88 = vdwg.mxu0
  %v89 = vadd.f32 %v19, %v83
  %v90 = vadd.f32 %v20, %v86
  %vm91 = vcmask 785408
  %92 = vst.msk [vmem:[#allocation2] sm:$0xff] %vm91, %v89
  %93 = vst.msk [vmem:[#allocation2 + $0x8] sm:$0xff] %vm91, %v90
  // Predicated region
  $region14: #{memory_efficient_attention.3} parent=0 // pred_check
    %p94 = pneg %p12
  $region15: #{memory_efficient_attention.3} parent=0 // pred_check_branch
    %96 = sbr.rel (%p94) target = $region17
  $region16: #{memory_efficient_attention.3} parent=0 // pred_region
    %v97 = vld [vmem:[#allocation2] sm:$0xff]
    %v98 = vld [vmem:[#allocation2 + $0x8] sm:$0xff]
    %v99 = vpack.c.bf16 %v98, %v97
    %v101 = vunpack.c.l.b16 %v99
    %v102 = vunpack.c.h.b16 %v99
    %v103 = vpack.c.b16 %v101, %v101
    %v104 = vpack.c.b16 %v102, %v102
    %vm107 = vcmask 781312
    %108 = vst.msk [vmem:[%s2] sm:$0xf] %vm107, %v103
    %109 = vst.msk [vmem:[%s2 + $0x4] sm:$0xf] %vm107, %v104
  $region17: #{memory_efficient_attention.3} parent=0 // pred_fallthru
    _
  // Predicated region
  $region18: #{memory_efficient_attention.3} parent=0 // pred_check
    _
  $region19: #{memory_efficient_attention.3} parent=0 // pred_check_branch
    %111 = sbr.rel (0) target = $region21
  $region20: #{memory_efficient_attention.3} parent=0 // pred_region
    _
  $region21: #{memory_efficient_attention.3} parent=0 // pred_fallthru
    _
  // Predicated region
  $region22: #{memory_efficient_attention.3} parent=0 // pred_check
    _
  $region23: #{memory_efficient_attention.3} parent=0 // pred_check_branch
    %113 = sbr.rel (0) target = $region25
  $region24: #{memory_efficient_attention.3} parent=0 // pred_region
    _
  $region25: #{memory_efficient_attention.3} parent=0 // pred_fallthru
    _

// kernel: memory_efficient_attention.5
$region0: #{memory_efficient_attention.5}
  #allocation0 [shape = 'u32[]', space=smem, size = 0x4, offset = 0x4, fixed_abs, tag = 'smem constant byte address 0x4 - core index']
  #allocation1 [shape = 'u32[144,128]{1,0:T(1,128)}', space=vmem, size = 0x12000, scoped, tag = 'internal scratch']
  #allocation2 [shape = 'f32[16,32]{1,0:T(8,128)}', space=vmem, size = 0x2000, scoped, tag = 'scratch operand']
  %s0 = inlined_call_operand.vmem [shape: bf16[16,32], index: 0, kind: input, shape index: {}]
  %s1 = inlined_call_operand.vmem [shape: bf16[32,32], index: 1, kind: input, shape index: {}]
  %s2 = inlined_call_operand.vmem [shape: f32[1,32], index: 2, kind: input, shape index: {}]
  %s3 = inlined_call_operand.hbm [shape: f32[16,32], index: 3, kind: output, shape index: {}]
  %s4 = sld [smem:[#allocation0]]
  $region30: #{memory_efficient_attention.5} parent=0
    _
  %s6 = ssub.s32 1, %s4
  %s7 = scalar_select 0, %s6, %s4
  $region1: #{memory_efficient_attention.5} parent=0
    #allocation3 [shape = 'u8[8192]{0}', space=vmem, size = 0x2000, scoped, tag = 'output window, operand 0, single buffered']
    #allocation4 [shape = 's32[1]{0}', space=sflag, size = 0x4, scoped, tag = 'scoped memory for memory_efficient_attention.5']
    %8 = vsyncpa [#allocation4], 0
    // Predicated region
    $region2: #{memory_efficient_attention.5} parent=1 // pred_check
      _
    $region3: #{memory_efficient_attention.5} parent=1 // pred_check_branch
      %10 = sbr.rel (0) target = $region5
    $region4: #{memory_efficient_attention.5} parent=1 // pred_region
      _
    $region5: #{memory_efficient_attention.5} parent=1 // pred_fallthru
      _
    // Predicated region
    $region6: #{memory_efficient_attention.5} parent=1 // pred_check
      _
    $region7: #{memory_efficient_attention.5} parent=1 // pred_check_branch
      %12 = sbr.rel (0) target = $region9
    $region8: #{memory_efficient_attention.5} parent=1 // pred_region
      _
    $region9: #{memory_efficient_attention.5} parent=1 // pred_fallthru
      _
    // Predicated region
    $region10: #{memory_efficient_attention.5} parent=1 // pred_check
      _
    $region11: #{memory_efficient_attention.5} parent=1 // pred_check_branch
      %14 = sbr.rel (0) target = $region13
    $region12: #{memory_efficient_attention.5} parent=1 // pred_region
      _
    $region13: #{memory_efficient_attention.5} parent=1 // pred_fallthru
      _
    %p16 = scmp.eq.s32.totalorder 0, 0
    // Predicated region
    $region14: #{memory_efficient_attention.5} parent=1 // pred_check
      %p17 = pneg %p16
    $region15: #{memory_efficient_attention.5} parent=1 // pred_check_branch
      %19 = sbr.rel (%p17) target = $region17
    $region16: #{memory_efficient_attention.5} parent=1 // pred_region
      %vm20 = vcmask 261120
      %21 = vst.msk [vmem:[#allocation2] sm:$0xff] %vm20, 0.0
      %22 = vst.msk [vmem:[#allocation2 + $0x8] sm:$0xff] %vm20, 0.0
    $region17: #{memory_efficient_attention.5} parent=1 // pred_fallthru
      _
    %v23 = vld [vmem:[#allocation2] sm:$0xff]
    %v24 = vld [vmem:[#allocation2 + $0x8] sm:$0xff]
    %v25 = vld [vmem:[%s0] sm:$0xf]
    %v26 = vld [vmem:[%s0 + $0x4] sm:$0xf]
    %v27 = vld [vmem:[%s1] sm:$0xf]
    %v28 = vld [vmem:[%s1 + $0x4] sm:$0xf]
    %v29 = vld [vmem:[%s1 + $0x8] sm:$0xf]
    %v30 = vld [vmem:[%s1 + $0xc] sm:$0xf]
    %v33 = vunpack.c.l.b16 %v25
    %v34 = vunpack.c.l.b16 %v26
    %v35 = vpack.c.b16 %v34, %v33
    %v40 = vunpack.c.l.b16 %v27
    %v41 = vunpack.c.l.b16 %v28
    %v42 = vunpack.c.l.b16 %v29
    %v43 = vunpack.c.l.b16 %v30
    %v44 = vpack.c.b16 %v41, %v40
    %v45 = vpack.c.b16 %v43, %v42
    %vm48 = vcmask 261120
    %v50 = vsel %vm48, %v35, 0
    %52 = vmatprep.subr.bf16.mxu0 0
    %53 = vmatpush1.bf16.msra.mxu0 %v44
    %54 = vmatprep.subr.bf16.mxu0 0
    %55 = vmatpush1.bf16.msra.mxu0 %v45
    %56 = vmatprep.subr.bf16.mxu0 0
    %57 = vmatpush1.bf16.msra.mxu0 0
    %58 = vmatprep.subr.bf16.mxu0 0
    %59 = vmatpush1.bf16.msra.mxu0 0
    %60 = vmatprep.subr.bf16.mxu0 0
    %61 = vmatpush1.bf16.msra.mxu0 0
    %62 = vmatprep.subr.bf16.mxu0 0
    %63 = vmatpush1.bf16.msra.mxu0 0
    %64 = vmatprep.subr.bf16.mxu0 0
    %65 = vmatpush1.bf16.msra.mxu0 0
    %66 = vmatprep.subr.bf16.mxu0 0
    %67 = vmatpush1.bf16.msra.mxu0 0
    %68 = vmatprep.subr.bf16.mxu0 0
    %69 = vmatpush1.bf16.msra.mxu0 0
    %70 = vmatprep.subr.bf16.mxu0 0
    %71 = vmatpush1.bf16.msra.mxu0 0
    %72 = vmatprep.subr.bf16.mxu0 0
    %73 = vmatpush1.bf16.msra.mxu0 0
    %74 = vmatprep.subr.bf16.mxu0 0
    %75 = vmatpush1.bf16.msra.mxu0 0
    %76 = vmatprep.subr.bf16.mxu0 0
    %77 = vmatpush1.bf16.msra.mxu0 0
    %78 = vmatprep.subr.bf16.mxu0 0
    %79 = vmatpush1.bf16.msra.mxu0 0
    %80 = vmatprep.subr.bf16.mxu0 0
    %81 = vmatpush1.bf16.msra.mxu0 0
    %82 = vmatprep.subr.bf16.mxu0 0
    %83 = vmatpush1.bf16.msra.mxu0 0
    %84 = vmatprep.mubr.bf16.mxu0 0
    %85 = vmatmul.mubr.bf16.gmra.mrb[0].mxu0 %v50
    %v86 = vpop.f32.mrb[0].mxu0
    %v87 = vadd.f32 0.0, %v86
    %v88 = vpop.f32.mrb[0].mxu0
    %v89 = vpop.f32.mrb[0].mxu0
    %v90 = vadd.f32 0.0, %v89
    %v91 = vpop.f32.mrb[0].mxu0
    %92 = vdwg.mxu0
    %v93 = vadd.f32 %v23, %v87
    %v94 = vadd.f32 %v24, %v90
    %95 = vst.msk [vmem:[#allocation2] sm:$0xff] %vm48, %v93
    %96 = vst.msk [vmem:[#allocation2 + $0x8] sm:$0xff] %vm48, %v94
    // Predicated region
    $region18: #{memory_efficient_attention.5} parent=1 // pred_check
      %p97 = pneg %p16
    $region19: #{memory_efficient_attention.5} parent=1 // pred_check_branch
      %99 = sbr.rel (%p97) target = $region21
    $region20: #{memory_efficient_attention.5} parent=1 // pred_region
      %v100 = vld [vmem:[#allocation2] sm:$0xff]
      %v101 = vld [vmem:[#allocation2 + $0x8] sm:$0xff]
      %v102 = vld [vmem:[%s2] sm:$0x1]
      %v104 = vlaneseq
      %v105 = vshrl.u32 %v104, 7
      %v106 = vsub.s32 0, %v105
      %v107 = vrot.slane %v102, %v106
      %v109 = vadd.f32 %v100, %v107
      %v110 = vadd.f32 %v101, %v107
      %111 = vst.msk [vmem:[#allocation3] sm:$0xff] %vm48, %v109
      %112 = vst.msk [vmem:[#allocation3 + $0x8] sm:$0xff] %vm48, %v110
    $region21: #{memory_efficient_attention.5} parent=1 // pred_fallthru
      _
    // Predicated region
    $region22: #{memory_efficient_attention.5} parent=1 // pred_check
      _
    $region23: #{memory_efficient_attention.5} parent=1 // pred_check_branch
      %114 = sbr.rel (0) target = $region25
    $region24: #{memory_efficient_attention.5} parent=1 // pred_region
      %s116 = ssub.s32 256, 256
      %117 = vsyncadd [#allocation4], %s116
      %s118 = sshll.u32 [#allocation3], 4
      %s119 = int_to_ptr.vmem [resolvable:$true] %s118
      %124 = dma.vmem_to_hbm [thread:$0]  %s119, 256, %s3, [#allocation4], 128, 128, 8
    $region25: #{memory_efficient_attention.5} parent=1 // pred_fallthru
      _
    // Predicated region
    $region26: #{memory_efficient_attention.5} parent=1 // pred_check
      _
    $region27: #{memory_efficient_attention.5} parent=1 // pred_check_branch
      %126 = sbr.rel (0) target = $region29
    $region28: #{memory_efficient_attention.5} parent=1 // pred_region
      %127 = dma.done [#allocation4], 256
    $region29: #{memory_efficient_attention.5} parent=1 // pred_fallthru
      _
    %128 = vsyncpa [#allocation4], 1

// kernel: memory_efficient_attention.4
$region0: #{memory_efficient_attention.4}
  #allocation0 [shape = 'u32[]', space=smem, size = 0x4, offset = 0x4, fixed_abs, tag = 'smem constant byte address 0x4 - core index']
  #allocation1 [shape = 'u32[144,128]{1,0:T(1,128)}', space=vmem, size = 0x12000, scoped, tag = 'internal scratch']
  #allocation2 [shape = 'f32[8,8,1]{2,1,0:T(8,128)}', space=vmem, size = 0x8000, scoped, tag = 'scratch operand']
  #allocation3 [shape = 'f32[8,8,1]{2,1,0:T(8,128)}', space=vmem, size = 0x8000, scoped, tag = 'scratch operand']
  #allocation4 [shape = 'f32[8,8,4]{2,1,0:T(8,128)}', space=vmem, size = 0x8000, scoped, tag = 'scratch operand']
  %s0 = inlined_call_operand.vmem [shape: bf16[2,8,8,4], index: 0, kind: input, shape index: {}]
  %s1 = inlined_call_operand.vmem [shape: bf16[2,8,8,4], index: 1, kind: input, shape index: {}]
  %s2 = inlined_call_operand.vmem [shape: bf16[2,8,8,4], index: 2, kind: input, shape index: {}]
  %s3 = inlined_call_operand.vmem [shape: bf16[2,8,32], index: 3, kind: output, shape index: {}]
  %s4 = sld [smem:[#allocation0]]
  $region53: #{memory_efficient_attention.4} parent=0
    _
  %s6 = ssub.s32 1, %s4
  %s7 = scalar_select 0, %s6, %s4
  loop: start=0, step=1, limit=4
  $region2: #{memory_efficient_attention.4} parent=0 // loop_pre_header
    _
  $region3: #{memory_efficient_attention.4} parent=0 // loop_header
    %s9 = sphi 0, %s13
    %p10 = scmp.ge.s32.totalorder %s9, 4
    %s16 = sphi 0, %s42
    %s17 = sphi 0, %s38
    %s18 = sphi 0, %s34
    %s19 = sphi 0, %s30
    %s20 = sphi 0, %s16
    %s21 = sphi 0, %s17
    %s22 = sphi 0, %s18
    %s23 = sphi 0, %s19
    %s24 = sphi 0, %s20
    %s25 = sphi 0, %s21
    %s26 = sphi 0, %s22
    %s27 = sphi 0, %s23
    %s49 = sphi 0, %s51
    %s52 = sphi 0, %s49
    %s53 = sphi 0, %s52
    %s69 = sphi 0, %s53
    %s79 = sphi 0, %s81
    %s82 = sphi 0, %s79
    %s83 = sphi 0, %s82
    %s99 = sphi 0, %s83
    %s109 = sphi 0, %s111
    %s112 = sphi 0, %s109
    %s113 = sphi 0, %s112
    %s129 = sphi 0, %s113
    %s139 = sphi 0, %s141
    %s142 = sphi 0, %s139
    %s143 = sphi 0, %s142
    %s159 = sphi 0, %s143
  $region4: #{memory_efficient_attention.4} parent=0 // loop_header_branch
    %12 = sbr.rel (%p10) target = $region8
  $region5: #{memory_efficient_attention.4} parent=0 // loop_body
    %s14 = ssub.s32 %s9, 1
    %s15 = ssub.s32 %s9, 2
    %s28 = sadd.s32 1, %s19
    %p29 = scmp.ge.s32.totalorder %s28, 1
    %s30 = scalar_select %p29, 0, %s28
    %s31 = sadd.s32 1, %s18
    %s32 = scalar_select %p29, %s31, %s18
    %p33 = scmp.ge.s32.totalorder %s32, 1
    %s34 = scalar_select %p33, 0, %s32
    %s35 = sadd.s32 1, %s17
    %s36 = scalar_select %p33, %s35, %s17
    %p37 = scmp.ge.s32.totalorder %s36, 1
    %s38 = scalar_select %p37, 0, %s36
    %s39 = sadd.s32 1, %s16
    %s40 = scalar_select %p37, %s39, %s16
    %p41 = scmp.ge.s32.totalorder %s40, 2
    %s42 = scalar_select %p41, 0, %s40
    %s43 = ssub.s32 %s16, %s42
    %s44 = ssub.s32 %s17, %s38
    %s45 = sor.u32 %s43, %s44
    %s46 = ssub.s32 %s18, %s34
    %s47 = sor.u32 %s45, %s46
    %p48 = scmp.eq.s32.totalorder %s47, 0
    %s50 = sadd.s32 %s49, 1
    %s51 = scalar_select %p48, %s49, %s50
    %p54 = pneg %p48
    %p55 = scmp.eq.s32.totalorder %s9, 1
    %p56 = por %p54, %p55
    %p57 = scmp.ne.s32.totalorder %s49, %s52
    %p58 = scmp.eq.s32.totalorder %s9, 0
    %p59 = por %p57, %p58
    %p60 = scmp.ne.s32.totalorder %s49, %s52
    %p61 = scmp.eq.s32.totalorder %s14, 1
    %p62 = por %p60, %p61
    %p63 = scmp.ne.s32.totalorder %s52, %s53
    %p64 = scmp.eq.s32.totalorder %s14, 0
    %p65 = por %p63, %p64
    %p66 = scmp.ne.s32.totalorder %s52, %s53
    %p67 = scmp.eq.s32.totalorder %s15, 1
    %p68 = por %p66, %p67
    %p70 = scmp.ne.s32.totalorder %s53, %s69
    %p71 = scmp.eq.s32.totalorder %s15, 0
    %p72 = por %p70, %p71
    %s73 = ssub.s32 %s16, %s42
    %s74 = ssub.s32 %s17, %s38
    %s75 = sor.u32 %s73, %s74
    %s76 = ssub.s32 %s19, %s30
    %s77 = sor.u32 %s75, %s76
    %p78 = scmp.eq.s32.totalorder %s77, 0
    %s80 = sadd.s32 %s79, 1
    %s81 = scalar_select %p78, %s79, %s80
    %p84 = pneg %p78
    %p85 = scmp.eq.s32.totalorder %s9, 1
    %p86 = por %p84, %p85
    %p87 = scmp.ne.s32.totalorder %s79, %s82
    %p88 = scmp.eq.s32.totalorder %s9, 0
    %p89 = por %p87, %p88
    %p90 = scmp.ne.s32.totalorder %s79, %s82
    %p91 = scmp.eq.s32.totalorder %s14, 1
    %p92 = por %p90, %p91
    %p93 = scmp.ne.s32.totalorder %s82, %s83
    %p94 = scmp.eq.s32.totalorder %s14, 0
    %p95 = por %p93, %p94
    %p96 = scmp.ne.s32.totalorder %s82, %s83
    %p97 = scmp.eq.s32.totalorder %s15, 1
    %p98 = por %p96, %p97
    %p100 = scmp.ne.s32.totalorder %s83, %s99
    %p101 = scmp.eq.s32.totalorder %s15, 0
    %p102 = por %p100, %p101
    %s103 = ssub.s32 %s16, %s42
    %s104 = ssub.s32 %s17, %s38
    %s105 = sor.u32 %s103, %s104
    %s106 = ssub.s32 %s19, %s30
    %s107 = sor.u32 %s105, %s106
    %p108 = scmp.eq.s32.totalorder %s107, 0
    %s110 = sadd.s32 %s109, 1
    %s111 = scalar_select %p108, %s109, %s110
    %p114 = pneg %p108
    %p115 = scmp.eq.s32.totalorder %s9, 1
    %p116 = por %p114, %p115
    %p117 = scmp.ne.s32.totalorder %s109, %s112
    %p118 = scmp.eq.s32.totalorder %s9, 0
    %p119 = por %p117, %p118
    %p120 = scmp.ne.s32.totalorder %s109, %s112
    %p121 = scmp.eq.s32.totalorder %s14, 1
    %p122 = por %p120, %p121
    %p123 = scmp.ne.s32.totalorder %s112, %s113
    %p124 = scmp.eq.s32.totalorder %s14, 0
    %p125 = por %p123, %p124
    %p126 = scmp.ne.s32.totalorder %s112, %s113
    %p127 = scmp.eq.s32.totalorder %s15, 1
    %p128 = por %p126, %p127
    %p130 = scmp.ne.s32.totalorder %s113, %s129
    %p131 = scmp.eq.s32.totalorder %s15, 0
    %p132 = por %p130, %p131
    %s133 = ssub.s32 %s16, %s42
    %s134 = ssub.s32 %s18, %s34
    %s135 = sor.u32 %s133, %s134
    %s136 = ssub.s32 %s17, %s38
    %s137 = sor.u32 %s135, %s136
    %p138 = scmp.eq.s32.totalorder %s137, 0
    %s140 = sadd.s32 %s139, 1
    %s141 = scalar_select %p138, %s139, %s140
    %p144 = pneg %p138
    %p145 = scmp.eq.s32.totalorder %s9, 1
    %p146 = por %p144, %p145
    %p147 = scmp.ne.s32.totalorder %s139, %s142
    %p148 = scmp.eq.s32.totalorder %s9, 0
    %p149 = por %p147, %p148
    %p150 = scmp.ne.s32.totalorder %s139, %s142
    %p151 = scmp.eq.s32.totalorder %s14, 1
    %p152 = por %p150, %p151
    %p153 = scmp.ne.s32.totalorder %s142, %s143
    %p154 = scmp.eq.s32.totalorder %s14, 0
    %p155 = por %p153, %p154
    %p156 = scmp.ne.s32.totalorder %s142, %s143
    %p157 = scmp.eq.s32.totalorder %s15, 1
    %p158 = por %p156, %p157
    %p160 = scmp.ne.s32.totalorder %s143, %s159
    %p161 = scmp.eq.s32.totalorder %s15, 0
    %p162 = por %p160, %p161
    %p163 = scmp.le.s32.totalorder 1, %s9
    %p164 = scmp.lt.s32.totalorder %s9, 3
    %p165 = pnand %p163, %p164
    %p166 = pneg %p165
    // Predicated region
    $region9: #{memory_efficient_attention.4} parent=5 // pred_check
      _
    $region10: #{memory_efficient_attention.4} parent=5 // pred_check_branch
      %168 = sbr.rel (%p165) target = $region12
    $region11: #{memory_efficient_attention.4} parent=5 // pred_region
      %s169 = ssub.s32 %s9, 1
    $region12: #{memory_efficient_attention.4} parent=5 // pred_fallthru
      _
    %p170 = scmp.lt.s32.totalorder %s9, 2
    // Predicated region
    $region13: #{memory_efficient_attention.4} parent=5 // pred_check
      %p171 = pneg %p170
    $region14: #{memory_efficient_attention.4} parent=5 // pred_check_branch
      %173 = sbr.rel (%p171) target = $region16
    $region15: #{memory_efficient_attention.4} parent=5 // pred_region
      // Predicated region
      $region17: #{memory_efficient_attention.4} parent=15 // pred_check
        %p174 = pneg %p59
      $region18: #{memory_efficient_attention.4} parent=15 // pred_check_branch
        %176 = sbr.rel (%p174) target = $region20
      $region19: #{memory_efficient_attention.4} parent=15 // pred_region
        %s177 = smul.u32 8, %s17
        %p178 = scmp.lt.s32.totalorder %s16, 1
        %s179 = scalar_select %p178, %s16, 1
        %p180 = scmp.lt.s32.totalorder %s177, 7
        %s181 = scalar_select %p180, %s177, 7
        %p182 = scmp.lt.s32.totalorder %s18, 0
        %s183 = scalar_select %p182, %s18, 0
        %s184 = sadd.s32 %s183, %s181
        %s185 = smul.addr %s179, 8
        %s186 = sadd.s32 %s184, %s185
        %s187 = smul.addr %s186, 4
        %s188 = scalar_lea.vmem %s0, %s187
        %s189 = smul.u32 8, %s17
      $region20: #{memory_efficient_attention.4} parent=15 // pred_fallthru
        _
      // Predicated region
      $region21: #{memory_efficient_attention.4} parent=15 // pred_check
        %p190 = pneg %p89
      $region22: #{memory_efficient_attention.4} parent=15 // pred_check_branch
        %192 = sbr.rel (%p190) target = $region24
      $region23: #{memory_efficient_attention.4} parent=15 // pred_region
        %s193 = smul.u32 8, %s17
        %p194 = scmp.lt.s32.totalorder %s16, 1
        %s195 = scalar_select %p194, %s16, 1
        %p196 = scmp.lt.s32.totalorder %s193, 7
        %s197 = scalar_select %p196, %s193, 7
        %p198 = scmp.lt.s32.totalorder %s19, 0
        %s199 = scalar_select %p198, %s19, 0
        %s200 = sadd.s32 %s199, %s197
        %s201 = smul.addr %s195, 8
        %s202 = sadd.s32 %s200, %s201
        %s203 = smul.addr %s202, 4
        %s204 = scalar_lea.vmem %s1, %s203
        %s205 = smul.u32 8, %s17
      $region24: #{memory_efficient_attention.4} parent=15 // pred_fallthru
        _
      // Predicated region
      $region25: #{memory_efficient_attention.4} parent=15 // pred_check
        %p206 = pneg %p119
      $region26: #{memory_efficient_attention.4} parent=15 // pred_check_branch
        %208 = sbr.rel (%p206) target = $region28
      $region27: #{memory_efficient_attention.4} parent=15 // pred_region
        %s209 = smul.u32 8, %s17
        %p210 = scmp.lt.s32.totalorder %s16, 1
        %s211 = scalar_select %p210, %s16, 1
        %p212 = scmp.lt.s32.totalorder %s209, 7
        %s213 = scalar_select %p212, %s209, 7
        %p214 = scmp.lt.s32.totalorder %s19, 0
        %s215 = scalar_select %p214, %s19, 0
        %s216 = sadd.s32 %s215, %s213
        %s217 = smul.addr %s211, 8
        %s218 = sadd.s32 %s216, %s217
        %s219 = smul.addr %s218, 4
        %s220 = scalar_lea.vmem %s2, %s219
        %s221 = smul.u32 8, %s17
      $region28: #{memory_efficient_attention.4} parent=15 // pred_fallthru
        _
    $region16: #{memory_efficient_attention.4} parent=5 // pred_fallthru
      _
    %p222 = scmp.le.s32.totalorder 1, %s9
    %p223 = scmp.lt.s32.totalorder %s9, 3
    %p224 = pnand %p222, %p223
    %p225 = pneg %p224
    // Predicated region
    $region29: #{memory_efficient_attention.4} parent=5 // pred_check
      _
    $region30: #{memory_efficient_attention.4} parent=5 // pred_check_branch
      %227 = sbr.rel (%p224) target = $region32
    $region31: #{memory_efficient_attention.4} parent=5 // pred_region
      %s228 = ssub.s32 %s9, 1
      %s229 = smul.u32 8, %s21
      %p230 = scmp.lt.s32.totalorder %s20, 1
      %s231 = scalar_select %p230, %s20, 1
      %p232 = scmp.lt.s32.totalorder %s229, 7
      %s233 = scalar_select %p232, %s229, 7
      %p234 = scmp.lt.s32.totalorder %s22, 0
      %s235 = scalar_select %p234, %s22, 0
      %s236 = sadd.s32 %s235, %s233
      %s237 = smul.addr %s231, 8
      %s238 = sadd.s32 %s236, %s237
      %s239 = smul.addr %s238, 4
      %s240 = scalar_lea.vmem %s0, %s239
      %p241 = pneg %p65
      %p242 = pneg %p62
      %s243 = smul.u32 8, %s21
      %p244 = scmp.lt.s32.totalorder %s20, 1
      %s245 = scalar_select %p244, %s20, 1
      %p246 = scmp.lt.s32.totalorder %s243, 7
      %s247 = scalar_select %p246, %s243, 7
      %p248 = scmp.lt.s32.totalorder %s23, 0
      %s249 = scalar_select %p248, %s23, 0
      %s250 = sadd.s32 %s249, %s247
      %s251 = smul.addr %s245, 8
      %s252 = sadd.s32 %s250, %s251
      %s253 = smul.addr %s252, 4
      %s254 = scalar_lea.vmem %s1, %s253
      %p255 = pneg %p95
      %p256 = pneg %p92
      %s257 = smul.u32 8, %s21
      %p258 = scmp.lt.s32.totalorder %s20, 1
      %s259 = scalar_select %p258, %s20, 1
      %p260 = scmp.lt.s32.totalorder %s257, 7
      %s261 = scalar_select %p260, %s257, 7
      %p262 = scmp.lt.s32.totalorder %s23, 0
      %s263 = scalar_select %p262, %s23, 0
      %s264 = sadd.s32 %s263, %s261
      %s265 = smul.addr %s259, 8
      %s266 = sadd.s32 %s264, %s265
      %s267 = smul.addr %s266, 4
      %s268 = scalar_lea.vmem %s2, %s267
      %p269 = pneg %p125
      %p270 = pneg %p122
      %p271 = pneg %p155
      %p272 = pneg %p152
      %p273 = scmp.lt.s32.totalorder %s20, 1
      %s274 = scalar_select %p273, %s20, 1
      %p275 = scmp.lt.s32.totalorder %s22, 0
      %s276 = scalar_select %p275, %s22, 0
      %p277 = scmp.lt.s32.totalorder %s21, 0
      %s278 = scalar_select %p277, %s21, 0
      %s279 = sadd.s32 %s278, %s276
      %s280 = sadd.s32 %s279, %s274
      %s281 = smul.addr %s280, 4
      %s282 = scalar_lea.vmem %s3, %s281
      %s283 = smul.u32 8, %s21
      %p284 = scmp.lt.s32.totalorder %s20, 1
      %s285 = scalar_select %p284, %s20, 1
      %p286 = scmp.lt.s32.totalorder %s283, 7
      %s287 = scalar_select %p286, %s283, 7
      %p288 = scmp.lt.s32.totalorder %s22, 0
      %s289 = scalar_select %p288, %s22, 0
      %s290 = sadd.s32 %s289, %s287
      %s291 = smul.addr %s285, 8
      %s292 = sadd.s32 %s290, %s291
      %s293 = smul.addr %s292, 4
      %s294 = scalar_lea.vmem %s0, %s293
      %s295 = smul.u32 8, %s21
      %s296 = smul.u32 8, %s21
      %p297 = scmp.lt.s32.totalorder %s20, 1
      %s298 = scalar_select %p297, %s20, 1
      %p299 = scmp.lt.s32.totalorder %s296, 7
      %s300 = scalar_select %p299, %s296, 7
      %p301 = scmp.lt.s32.totalorder %s23, 0
      %s302 = scalar_select %p301, %s23, 0
      %s303 = sadd.s32 %s302, %s300
      %s304 = smul.addr %s298, 8
      %s305 = sadd.s32 %s303, %s304
      %s306 = smul.addr %s305, 4
      %s307 = scalar_lea.vmem %s1, %s306
      %s308 = smul.u32 8, %s21
      %s309 = smul.u32 8, %s21
      %p310 = scmp.lt.s32.totalorder %s20, 1
      %s311 = scalar_select %p310, %s20, 1
      %p312 = scmp.lt.s32.totalorder %s309, 7
      %s313 = scalar_select %p312, %s309, 7
      %p314 = scmp.lt.s32.totalorder %s23, 0
      %s315 = scalar_select %p314, %s23, 0
      %s316 = sadd.s32 %s315, %s313
      %s317 = smul.addr %s311, 8
      %s318 = sadd.s32 %s316, %s317
      %s319 = smul.addr %s318, 4
      %s320 = scalar_lea.vmem %s2, %s319
      %s321 = smul.u32 8, %s21
      %p322 = scmp.lt.s32.totalorder %s20, 1
      %s323 = scalar_select %p322, %s20, 1
      %p324 = scmp.lt.s32.totalorder %s22, 0
      %s325 = scalar_select %p324, %s22, 0
      %p326 = scmp.lt.s32.totalorder %s21, 0
      %s327 = scalar_select %p326, %s21, 0
      %s328 = sadd.s32 %s327, %s325
      %s329 = sadd.s32 %s328, %s323
      %s330 = smul.addr %s329, 4
      %s331 = scalar_lea.vmem %s3, %s330
      %p333 = scmp.eq.s32.totalorder %s23, 0
      // Predicated region
      $region33: #{memory_efficient_attention.4} parent=31 // pred_check
        %p334 = pneg %p333
      $region34: #{memory_efficient_attention.4} parent=31 // pred_check_branch
        %336 = sbr.rel (%p334) target = $region36
      $region35: #{memory_efficient_attention.4} parent=31 // pred_region
        %vm337 = vcmask 7168
        %338 = vst.msk [vmem:[#allocation2] sm:$0xff] %vm337, -inf
        %339 = vst.msk [vmem:[#allocation2 + $0x8] sm:$0xff] %vm337, -inf
        %340 = vst.msk [vmem:[#allocation2 + $0x10] sm:$0xff] %vm337, -inf
        %341 = vst.msk [vmem:[#allocation2 + $0x18] sm:$0xff] %vm337, -inf
        %342 = vst.msk [vmem:[#allocation2 + $0x20] sm:$0xff] %vm337, -inf
        %343 = vst.msk [vmem:[#allocation2 + $0x28] sm:$0xff] %vm337, -inf
        %344 = vst.msk [vmem:[#allocation2 + $0x30] sm:$0xff] %vm337, -inf
        %345 = vst.msk [vmem:[#allocation2 + $0x38] sm:$0xff] %vm337, -inf
        %346 = vst.msk [vmem:[#allocation3] sm:$0xff] %vm337, 0.0
        %347 = vst.msk [vmem:[#allocation3 + $0x8] sm:$0xff] %vm337, 0.0
        %348 = vst.msk [vmem:[#allocation3 + $0x10] sm:$0xff] %vm337, 0.0
        %349 = vst.msk [vmem:[#allocation3 + $0x18] sm:$0xff] %vm337, 0.0
        %350 = vst.msk [vmem:[#allocation3 + $0x20] sm:$0xff] %vm337, 0.0
        %351 = vst.msk [vmem:[#allocation3 + $0x28] sm:$0xff] %vm337, 0.0
        %352 = vst.msk [vmem:[#allocation3 + $0x30] sm:$0xff] %vm337, 0.0
        %353 = vst.msk [vmem:[#allocation3 + $0x38] sm:$0xff] %vm337, 0.0
        %vm354 = vcmask 31744
        %355 = vst.msk [vmem:[#allocation4] sm:$0xff] %vm354, 0.0
        %356 = vst.msk [vmem:[#allocation4 + $0x8] sm:$0xff] %vm354, 0.0
        %357 = vst.msk [vmem:[#allocation4 + $0x10] sm:$0xff] %vm354, 0.0
        %358 = vst.msk [vmem:[#allocation4 + $0x18] sm:$0xff] %vm354, 0.0
        %359 = vst.msk [vmem:[#allocation4 + $0x20] sm:$0xff] %vm354, 0.0
        %360 = vst.msk [vmem:[#allocation4 + $0x28] sm:$0xff] %vm354, 0.0
        %361 = vst.msk [vmem:[#allocation4 + $0x30] sm:$0xff] %vm354, 0.0
        %362 = vst.msk [vmem:[#allocation4 + $0x38] sm:$0xff] %vm354, 0.0
      $region36: #{memory_efficient_attention.4} parent=31 // pred_fallthru
        _
      %v363 = vld [vmem:[%s294] sm:$0xf]
      %v364 = vld [vmem:[%s294 + $0x4] sm:$0xf]
      %v365 = vld [vmem:[%s294 + $0x8] sm:$0xf]
      %v366 = vld [vmem:[%s294 + $0xc] sm:$0xf]
      %v367 = vld [vmem:[%s294 + $0x10] sm:$0xf]
      %v368 = vld [vmem:[%s294 + $0x14] sm:$0xf]
      %v369 = vld [vmem:[%s294 + $0x18] sm:$0xf]
      %v370 = vld [vmem:[%s294 + $0x1c] sm:$0xf]
      %v371 = vld [vmem:[%s307] sm:$0xf]
      %v372 = vld [vmem:[%s307 + $0x4] sm:$0xf]
      %v373 = vld [vmem:[%s307 + $0x8] sm:$0xf]
      %v374 = vld [vmem:[%s307 + $0xc] sm:$0xf]
      %v375 = vld [vmem:[%s307 + $0x10] sm:$0xf]
      %v376 = vld [vmem:[%s307 + $0x14] sm:$0xf]
      %v377 = vld [vmem:[%s307 + $0x18] sm:$0xf]
      %v378 = vld [vmem:[%s307 + $0x1c] sm:$0xf]
      %vm379 = vcmask 31744
      %v381 = vsel %vm379, %v363, 0
      %v384 = vsel %vm379, %v371, 0
      %386 = vmatprep.subr.bf16.mxu0 0
      %387 = vmatpush1.bf16.xpose.msra.mxu0 %v384
      %388 = vmatprep.subr.bf16.mxu0 0
      %389 = vmatpush1.bf16.xpose.msra.mxu0 0
      %390 = vmatprep.subr.bf16.mxu0 0
      %391 = vmatpush1.bf16.xpose.msra.mxu0 0
      %392 = vmatprep.subr.bf16.mxu0 0
      %393 = vmatpush1.bf16.xpose.msra.mxu0 0
      %394 = vmatprep.subr.bf16.mxu0 0
      %395 = vmatpush1.bf16.xpose.msra.mxu0 0
      %396 = vmatprep.subr.bf16.mxu0 0
      %397 = vmatpush1.bf16.xpose.msra.mxu0 0
      %398 = vmatprep.subr.bf16.mxu0 0
      %399 = vmatpush1.bf16.xpose.msra.mxu0 0
      %400 = vmatprep.subr.bf16.mxu0 0
      %401 = vmatpush1.bf16.xpose.msra.mxu0 0
      %402 = vmatprep.subr.bf16.mxu0 0
      %403 = vmatpush1.bf16.xpose.msra.mxu0 0
      %404 = vmatprep.subr.bf16.mxu0 0
      %405 = vmatpush1.bf16.xpose.msra.mxu0 0
      %406 = vmatprep.subr.bf16.mxu0 0
      %407 = vmatpush1.bf16.xpose.msra.mxu0 0
      %408 = vmatprep.subr.bf16.mxu0 0
      %409 = vmatpush1.bf16.xpose.msra.mxu0 0
      %410 = vmatprep.subr.bf16.mxu0 0
      %411 = vmatpush1.bf16.xpose.msra.mxu0 0
      %412 = vmatprep.subr.bf16.mxu0 0
      %413 = vmatpush1.bf16.xpose.msra.mxu0 0
      %414 = vmatprep.subr.bf16.mxu0 0
      %415 = vmatpush1.bf16.xpose.msra.mxu0 0
      %416 = vmatprep.subr.bf16.mxu0 0
      %417 = vmatpush1.bf16.xpose.msra.mxu0 0
      %418 = vmatprep.mubr.bf16.mxu0 0
      %419 = vmatmul.mubr.bf16.gmra.mrb[0].mxu0 %v381
      %v420 = vpop.f32.mrb[0].mxu0
      %v421 = vadd.f32 0.0, %v420
      %v422 = vpop.f32.mrb[0].mxu0
      %v423 = vpop.f32.mrb[0].mxu0
      %v424 = vpop.f32.mrb[0].mxu0
      %425 = vdwg.mxu0
      %v427 = vsel %vm379, %v364, 0
      %v430 = vsel %vm379, %v372, 0
      %432 = vmatprep.subr.bf16.mxu0 0
      %433 = vmatpush1.bf16.xpose.msra.mxu0 %v430
      %434 = vmatprep.subr.bf16.mxu0 0
      %435 = vmatpush1.bf16.xpose.msra.mxu0 0
      %436 = vmatprep.subr.bf16.mxu0 0
      %437 = vmatpush1.bf16.xpose.msra.mxu0 0
      %438 = vmatprep.subr.bf16.mxu0 0
      %439 = vmatpush1.bf16.xpose.msra.mxu0 0
      %440 = vmatprep.subr.bf16.mxu0 0
      %441 = vmatpush1.bf16.xpose.msra.mxu0 0
      %442 = vmatprep.subr.bf16.mxu0 0
      %443 = vmatpush1.bf16.xpose.msra.mxu0 0
      %444 = vmatprep.subr.bf16.mxu0 0
      %445 = vmatpush1.bf16.xpose.msra.mxu0 0
      %446 = vmatprep.subr.bf16.mxu0 0
      %447 = vmatpush1.bf16.xpose.msra.mxu0 0
      %448 = vmatprep.subr.bf16.mxu0 0
      %449 = vmatpush1.bf16.xpose.msra.mxu0 0
      %450 = vmatprep.subr.bf16.mxu0 0
      %451 = vmatpush1.bf16.xpose.msra.mxu0 0
      %452 = vmatprep.subr.bf16.mxu0 0
      %453 = vmatpush1.bf16.xpose.msra.mxu0 0
      %454 = vmatprep.subr.bf16.mxu0 0
      %455 = vmatpush1.bf16.xpose.msra.mxu0 0
      %456 = vmatprep.subr.bf16.mxu0 0
      %457 = vmatpush1.bf16.xpose.msra.mxu0 0
      %458 = vmatprep.subr.bf16.mxu0 0
      %459 = vmatpush1.bf16.xpose.msra.mxu0 0
      %460 = vmatprep.subr.bf16.mxu0 0
      %461 = vmatpush1.bf16.xpose.msra.mxu0 0
      %462 = vmatprep.subr.bf16.mxu0 0
      %463 = vmatpush1.bf16.xpose.msra.mxu0 0
      %464 = vmatprep.mubr.bf16.mxu0 0
      %465 = vmatmul.mubr.bf16.gmra.mrb[0].mxu0 %v427
      %v466 = vpop.f32.mrb[0].mxu0
      %v467 = vadd.f32 0.0, %v466
      %v468 = vpop.f32.mrb[0].mxu0
      %v469 = vpop.f32.mrb[0].mxu0
      %v470 = vpop.f32.mrb[0].mxu0
      %471 = vdwg.mxu0
      %v473 = vsel %vm379, %v365, 0
      %v476 = vsel %vm379, %v373, 0
      %478 = vmatprep.subr.bf16.mxu0 0
      %479 = vmatpush1.bf16.xpose.msra.mxu0 %v476
      %480 = vmatprep.subr.bf16.mxu0 0
      %481 = vmatpush1.bf16.xpose.msra.mxu0 0
      %482 = vmatprep.subr.bf16.mxu0 0
      %483 = vmatpush1.bf16.xpose.msra.mxu0 0
      %484 = vmatprep.subr.bf16.mxu0 0
      %485 = vmatpush1.bf16.xpose.msra.mxu0 0
      %486 = vmatprep.subr.bf16.mxu0 0
      %487 = vmatpush1.bf16.xpose.msra.mxu0 0
      %488 = vmatprep.subr.bf16.mxu0 0
      %489 = vmatpush1.bf16.xpose.msra.mxu0 0
      %490 = vmatprep.subr.bf16.mxu0 0
      %491 = vmatpush1.bf16.xpose.msra.mxu0 0
      %492 = vmatprep.subr.bf16.mxu0 0
      %493 = vmatpush1.bf16.xpose.msra.mxu0 0
      %494 = vmatprep.subr.bf16.mxu0 0
      %495 = vmatpush1.bf16.xpose.msra.mxu0 0
      %496 = vmatprep.subr.bf16.mxu0 0
      %497 = vmatpush1.bf16.xpose.msra.mxu0 0
      %498 = vmatprep.subr.bf16.mxu0 0
      %499 = vmatpush1.bf16.xpose.msra.mxu0 0
      %500 = vmatprep.subr.bf16.mxu0 0
      %501 = vmatpush1.bf16.xpose.msra.mxu0 0
      %502 = vmatprep.subr.bf16.mxu0 0
      %503 = vmatpush1.bf16.xpose.msra.mxu0 0
      %504 = vmatprep.subr.bf16.mxu0 0
      %505 = vmatpush1.bf16.xpose.msra.mxu0 0
      %506 = vmatprep.subr.bf16.mxu0 0
      %507 = vmatpush1.bf16.xpose.msra.mxu0 0
      %508 = vmatprep.subr.bf16.mxu0 0
      %509 = vmatpush1.bf16.xpose.msra.mxu0 0
      %510 = vmatprep.mubr.bf16.mxu0 0
      %511 = vmatmul.mubr.bf16.gmra.mrb[0].mxu0 %v473
      %v512 = vpop.f32.mrb[0].mxu0
      %v513 = vadd.f32 0.0, %v512
      %v514 = vpop.f32.mrb[0].mxu0
      %v515 = vpop.f32.mrb[0].mxu0
      %v516 = vpop.f32.mrb[0].mxu0
      %517 = vdwg.mxu0
      %v519 = vsel %vm379, %v366, 0
      %v522 = vsel %vm379, %v374, 0
      %524 = vmatprep.subr.bf16.mxu0 0
      %525 = vmatpush1.bf16.xpose.msra.mxu0 %v522
      %526 = vmatprep.subr.bf16.mxu0 0
      %527 = vmatpush1.bf16.xpose.msra.mxu0 0
      %528 = vmatprep.subr.bf16.mxu0 0
      %529 = vmatpush1.bf16.xpose.msra.mxu0 0
      %530 = vmatprep.subr.bf16.mxu0 0
      %531 = vmatpush1.bf16.xpose.msra.mxu0 0
      %532 = vmatprep.subr.bf16.mxu0 0
      %533 = vmatpush1.bf16.xpose.msra.mxu0 0
      %534 = vmatprep.subr.bf16.mxu0 0
      %535 = vmatpush1.bf16.xpose.msra.mxu0 0
      %536 = vmatprep.subr.bf16.mxu0 0
      %537 = vmatpush1.bf16.xpose.msra.mxu0 0
      %538 = vmatprep.subr.bf16.mxu0 0
      %539 = vmatpush1.bf16.xpose.msra.mxu0 0
      %540 = vmatprep.subr.bf16.mxu0 0
      %541 = vmatpush1.bf16.xpose.msra.mxu0 0
      %542 = vmatprep.subr.bf16.mxu0 0
      %543 = vmatpush1.bf16.xpose.msra.mxu0 0
      %544 = vmatprep.subr.bf16.mxu0 0
      %545 = vmatpush1.bf16.xpose.msra.mxu0 0
      %546 = vmatprep.subr.bf16.mxu0 0
      %547 = vmatpush1.bf16.xpose.msra.mxu0 0
      %548 = vmatprep.subr.bf16.mxu0 0
      %549 = vmatpush1.bf16.xpose.msra.mxu0 0
      %550 = vmatprep.subr.bf16.mxu0 0
      %551 = vmatpush1.bf16.xpose.msra.mxu0 0
      %552 = vmatprep.subr.bf16.mxu0 0
      %553 = vmatpush1.bf16.xpose.msra.mxu0 0
      %554 = vmatprep.subr.bf16.mxu0 0
      %555 = vmatpush1.bf16.xpose.msra.mxu0 0
      %556 = vmatprep.mubr.bf16.mxu0 0
      %557 = vmatmul.mubr.bf16.gmra.mrb[0].mxu0 %v519
      %v558 = vpop.f32.mrb[0].mxu0
      %v559 = vadd.f32 0.0, %v558
      %v560 = vpop.f32.mrb[0].mxu0
      %v561 = vpop.f32.mrb[0].mxu0
      %v562 = vpop.f32.mrb[0].mxu0
      %563 = vdwg.mxu0
      %v565 = vsel %vm379, %v367, 0
      %v568 = vsel %vm379, %v375, 0
      %570 = vmatprep.subr.bf16.mxu0 0
      %571 = vmatpush1.bf16.xpose.msra.mxu0 %v568
      %572 = vmatprep.subr.bf16.mxu0 0
      %573 = vmatpush1.bf16.xpose.msra.mxu0 0
      %574 = vmatprep.subr.bf16.mxu0 0
      %575 = vmatpush1.bf16.xpose.msra.mxu0 0
      %576 = vmatprep.subr.bf16.mxu0 0
      %577 = vmatpush1.bf16.xpose.msra.mxu0 0
      %578 = vmatprep.subr.bf16.mxu0 0
      %579 = vmatpush1.bf16.xpose.msra.mxu0 0
      %580 = vmatprep.subr.bf16.mxu0 0
      %581 = vmatpush1.bf16.xpose.msra.mxu0 0
      %582 = vmatprep.subr.bf16.mxu0 0
      %583 = vmatpush1.bf16.xpose.msra.mxu0 0
      %584 = vmatprep.subr.bf16.mxu0 0
      %585 = vmatpush1.bf16.xpose.msra.mxu0 0
      %586 = vmatprep.subr.bf16.mxu0 0
      %587 = vmatpush1.bf16.xpose.msra.mxu0 0
      %588 = vmatprep.subr.bf16.mxu0 0
      %589 = vmatpush1.bf16.xpose.msra.mxu0 0
      %590 = vmatprep.subr.bf16.mxu0 0
      %591 = vmatpush1.bf16.xpose.msra.mxu0 0
      %592 = vmatprep.subr.bf16.mxu0 0
      %593 = vmatpush1.bf16.xpose.msra.mxu0 0
      %594 = vmatprep.subr.bf16.mxu0 0
      %595 = vmatpush1.bf16.xpose.msra.mxu0 0
      %596 = vmatprep.subr.bf16.mxu0 0
      %597 = vmatpush1.bf16.xpose.msra.mxu0 0
      %598 = vmatprep.subr.bf16.mxu0 0
      %599 = vmatpush1.bf16.xpose.msra.mxu0 0
      %600 = vmatprep.subr.bf16.mxu0 0
      %601 = vmatpush1.bf16.xpose.msra.mxu0 0
      %602 = vmatprep.mubr.bf16.mxu0 0
      %603 = vmatmul.mubr.bf16.gmra.mrb[0].mxu0 %v565
      %v604 = vpop.f32.mrb[0].mxu0
      %v605 = vadd.f32 0.0, %v604
      %v606 = vpop.f32.mrb[0].mxu0
      %v607 = vpop.f32.mrb[0].mxu0
      %v608 = vpop.f32.mrb[0].mxu0
      %609 = vdwg.mxu0
      %v611 = vsel %vm379, %v368, 0
      %v614 = vsel %vm379, %v376, 0
      %616 = vmatprep.subr.bf16.mxu0 0
      %617 = vmatpush1.bf16.xpose.msra.mxu0 %v614
      %618 = vmatprep.subr.bf16.mxu0 0
      %619 = vmatpush1.bf16.xpose.msra.mxu0 0
      %620 = vmatprep.subr.bf16.mxu0 0
      %621 = vmatpush1.bf16.xpose.msra.mxu0 0
      %622 = vmatprep.subr.bf16.mxu0 0
      %623 = vmatpush1.bf16.xpose.msra.mxu0 0
      %624 = vmatprep.subr.bf16.mxu0 0
      %625 = vmatpush1.bf16.xpose.msra.mxu0 0
      %626 = vmatprep.subr.bf16.mxu0 0
      %627 = vmatpush1.bf16.xpose.msra.mxu0 0
      %628 = vmatprep.subr.bf16.mxu0 0
      %629 = vmatpush1.bf16.xpose.msra.mxu0 0
      %630 = vmatprep.subr.bf16.mxu0 0
      %631 = vmatpush1.bf16.xpose.msra.mxu0 0
      %632 = vmatprep.subr.bf16.mxu0 0
      %633 = vmatpush1.bf16.xpose.msra.mxu0 0
      %634 = vmatprep.subr.bf16.mxu0 0
      %635 = vmatpush1.bf16.xpose.msra.mxu0 0
      %636 = vmatprep.subr.bf16.mxu0 0
      %637 = vmatpush1.bf16.xpose.msra.mxu0 0
      %638 = vmatprep.subr.bf16.mxu0 0
      %639 = vmatpush1.bf16.xpose.msra.mxu0 0
      %640 = vmatprep.subr.bf16.mxu0 0
      %641 = vmatpush1.bf16.xpose.msra.mxu0 0
      %642 = vmatprep.subr.bf16.mxu0 0
      %643 = vmatpush1.bf16.xpose.msra.mxu0 0
      %644 = vmatprep.subr.bf16.mxu0 0
      %645 = vmatpush1.bf16.xpose.msra.mxu0 0
      %646 = vmatprep.subr.bf16.mxu0 0
      %647 = vmatpush1.bf16.xpose.msra.mxu0 0
      %648 = vmatprep.mubr.bf16.mxu0 0
      %649 = vmatmul.mubr.bf16.gmra.mrb[0].mxu0 %v611
      %v650 = vpop.f32.mrb[0].mxu0
      %v651 = vadd.f32 0.0, %v650
      %v652 = vpop.f32.mrb[0].mxu0
      %v653 = vpop.f32.mrb[0].mxu0
      %v654 = vpop.f32.mrb[0].mxu0
      %655 = vdwg.mxu0
      %v657 = vsel %vm379, %v369, 0
      %v660 = vsel %vm379, %v377, 0
      %662 = vmatprep.subr.bf16.mxu0 0
      %663 = vmatpush1.bf16.xpose.msra.mxu0 %v660
      %664 = vmatprep.subr.bf16.mxu0 0
      %665 = vmatpush1.bf16.xpose.msra.mxu0 0
      %666 = vmatprep.subr.bf16.mxu0 0
      %667 = vmatpush1.bf16.xpose.msra.mxu0 0
      %668 = vmatprep.subr.bf16.mxu0 0
      %669 = vmatpush1.bf16.xpose.msra.mxu0 0
      %670 = vmatprep.subr.bf16.mxu0 0
      %671 = vmatpush1.bf16.xpose.msra.mxu0 0
      %672 = vmatprep.subr.bf16.mxu0 0
      %673 = vmatpush1.bf16.xpose.msra.mxu0 0
      %674 = vmatprep.subr.bf16.mxu0 0
      %675 = vmatpush1.bf16.xpose.msra.mxu0 0
      %676 = vmatprep.subr.bf16.mxu0 0
      %677 = vmatpush1.bf16.xpose.msra.mxu0 0
      %678 = vmatprep.subr.bf16.mxu0 0
      %679 = vmatpush1.bf16.xpose.msra.mxu0 0
      %680 = vmatprep.subr.bf16.mxu0 0
      %681 = vmatpush1.bf16.xpose.msra.mxu0 0
      %682 = vmatprep.subr.bf16.mxu0 0
      %683 = vmatpush1.bf16.xpose.msra.mxu0 0
      %684 = vmatprep.subr.bf16.mxu0 0
      %685 = vmatpush1.bf16.xpose.msra.mxu0 0
      %686 = vmatprep.subr.bf16.mxu0 0
      %687 = vmatpush1.bf16.xpose.msra.mxu0 0
      %688 = vmatprep.subr.bf16.mxu0 0
      %689 = vmatpush1.bf16.xpose.msra.mxu0 0
      %690 = vmatprep.subr.bf16.mxu0 0
      %691 = vmatpush1.bf16.xpose.msra.mxu0 0
      %692 = vmatprep.subr.bf16.mxu0 0
      %693 = vmatpush1.bf16.xpose.msra.mxu0 0
      %694 = vmatprep.mubr.bf16.mxu0 0
      %695 = vmatmul.mubr.bf16.gmra.mrb[0].mxu0 %v657
      %v696 = vpop.f32.mrb[0].mxu0
      %v697 = vadd.f32 0.0, %v696
      %v698 = vpop.f32.mrb[0].mxu0
      %v699 = vpop.f32.mrb[0].mxu0
      %v700 = vpop.f32.mrb[0].mxu0
      %701 = vdwg.mxu0
      %v703 = vsel %vm379, %v370, 0
      %v706 = vsel %vm379, %v378, 0
      %708 = vmatprep.subr.bf16.mxu0 0
      %709 = vmatpush1.bf16.xpose.msra.mxu0 %v706
      %710 = vmatprep.subr.bf16.mxu0 0
      %711 = vmatpush1.bf16.xpose.msra.mxu0 0
      %712 = vmatprep.subr.bf16.mxu0 0
      %713 = vmatpush1.bf16.xpose.msra.mxu0 0
      %714 = vmatprep.subr.bf16.mxu0 0
      %715 = vmatpush1.bf16.xpose.msra.mxu0 0
      %716 = vmatprep.subr.bf16.mxu0 0
      %717 = vmatpush1.bf16.xpose.msra.mxu0 0
      %718 = vmatprep.subr.bf16.mxu0 0
      %719 = vmatpush1.bf16.xpose.msra.mxu0 0
      %720 = vmatprep.subr.bf16.mxu0 0
      %721 = vmatpush1.bf16.xpose.msra.mxu0 0
      %722 = vmatprep.subr.bf16.mxu0 0
      %723 = vmatpush1.bf16.xpose.msra.mxu0 0
      %724 = vmatprep.subr.bf16.mxu0 0
      %725 = vmatpush1.bf16.xpose.msra.mxu0 0
      %726 = vmatprep.subr.bf16.mxu0 0
      %727 = vmatpush1.bf16.xpose.msra.mxu0 0
      %728 = vmatprep.subr.bf16.mxu0 0
      %729 = vmatpush1.bf16.xpose.msra.mxu0 0
      %730 = vmatprep.subr.bf16.mxu0 0
      %731 = vmatpush1.bf16.xpose.msra.mxu0 0
      %732 = vmatprep.subr.bf16.mxu0 0
      %733 = vmatpush1.bf16.xpose.msra.mxu0 0
      %734 = vmatprep.subr.bf16.mxu0 0
      %735 = vmatpush1.bf16.xpose.msra.mxu0 0
      %736 = vmatprep.subr.bf16.mxu0 0
      %737 = vmatpush1.bf16.xpose.msra.mxu0 0
      %738 = vmatprep.subr.bf16.mxu0 0
      %739 = vmatpush1.bf16.xpose.msra.mxu0 0
      %740 = vmatprep.mubr.bf16.mxu0 0
      %741 = vmatmul.mubr.bf16.gmra.mrb[0].mxu0 %v703
      %v742 = vpop.f32.mrb[0].mxu0
      %v743 = vadd.f32 0.0, %v742
      %v744 = vpop.f32.mrb[0].mxu0
      %v745 = vpop.f32.mrb[0].mxu0
      %v746 = vpop.f32.mrb[0].mxu0
      %747 = vdwg.mxu0
      %v748 = vld [vmem:[#allocation2] sm:$0xff]
      %v749 = vld [vmem:[#allocation2 + $0x8] sm:$0xff]
      %v750 = vld [vmem:[#allocation2 + $0x10] sm:$0xff]
      %v751 = vld [vmem:[#allocation2 + $0x18] sm:$0xff]
      %v752 = vld [vmem:[#allocation2 + $0x20] sm:$0xff]
      %v753 = vld [vmem:[#allocation2 + $0x28] sm:$0xff]
      %v754 = vld [vmem:[#allocation2 + $0x30] sm:$0xff]
      %v755 = vld [vmem:[#allocation2 + $0x38] sm:$0xff]
      %vm756 = vcmask 64512
      %v757 = vsel %vm756, %v421, -inf
      %758 = vmax.xlane.f32.xlu0 %v757
      %v759 = vpop.xlane.xlu0 %758
      %v760 = vsel %vm756, %v467, -inf
      %761 = vmax.xlane.f32.xlu0 %v760
      %v762 = vpop.xlane.xlu0 %761
      %v763 = vsel %vm756, %v513, -inf
      %764 = vmax.xlane.f32.xlu0 %v763
      %v765 = vpop.xlane.xlu0 %764
      %v766 = vsel %vm756, %v559, -inf
      %767 = vmax.xlane.f32.xlu0 %v766
      %v768 = vpop.xlane.xlu0 %767
      %v769 = vsel %vm756, %v605, -inf
      %770 = vmax.xlane.f32.xlu0 %v769
      %v771 = vpop.xlane.xlu0 %770
      %v772 = vsel %vm756, %v651, -inf
      %773 = vmax.xlane.f32.xlu0 %v772
      %v774 = vpop.xlane.xlu0 %773
      %v775 = vsel %vm756, %v697, -inf
      %776 = vmax.xlane.f32.xlu0 %v775
      %v777 = vpop.xlane.xlu0 %776
      %v778 = vsel %vm756, %v743, -inf
      %779 = vmax.xlane.f32.xlu0 %v778
      %v780 = vpop.xlane.xlu0 %779
      %v781 = vmax.f32 %v748, %v759
      %v782 = vmax.f32 %v749, %v762
      %v783 = vmax.f32 %v750, %v765
      %v784 = vmax.f32 %v751, %v768
      %v785 = vmax.f32 %v752, %v771
      %v786 = vmax.f32 %v753, %v774
      %v787 = vmax.f32 %v754, %v777
      %v788 = vmax.f32 %v755, %v780
      %v789 = vsub.f32 %v748, %v781
      %v790 = vsub.f32 %v749, %v782
      %v791 = vsub.f32 %v750, %v783
      %v792 = vsub.f32 %v751, %v784
      %v793 = vsub.f32 %v752, %v785
      %v794 = vsub.f32 %v753, %v786
      %v795 = vsub.f32 %v754, %v787
      %v796 = vsub.f32 %v755, %v788
      %v797 = vmul.f32 %v789, 1.442695
      %v798 = vpow.pop %v797
      %v799 = vmul.f32 %v790, 1.442695
      %v800 = vpow.pop %v799
      %v801 = vmul.f32 %v791, 1.442695
      %v802 = vpow.pop %v801
      %v803 = vmul.f32 %v792, 1.442695
      %v804 = vpow.pop %v803
      %v805 = vmul.f32 %v793, 1.442695
      %v806 = vpow.pop %v805
      %v807 = vmul.f32 %v794, 1.442695
      %v808 = vpow.pop %v807
      %v809 = vmul.f32 %v795, 1.442695
      %v810 = vpow.pop %v809
      %v811 = vmul.f32 %v796, 1.442695
      %v812 = vpow.pop %v811
      %814 = vset.pattern.permute.xlu0 0
      %815 = vperm.xlu0 %814, %v781
      %v816 = vpop.permute.xlu0 %815
      %819 = vset.pattern.permute.xlu0 0
      %820 = vperm.xlu0 %819, %v782
      %v821 = vpop.permute.xlu0 %820
      %824 = vset.pattern.permute.xlu0 0
      %825 = vperm.xlu0 %824, %v783
      %v826 = vpop.permute.xlu0 %825
      %829 = vset.pattern.permute.xlu0 0
      %830 = vperm.xlu0 %829, %v784
      %v831 = vpop.permute.xlu0 %830
      %834 = vset.pattern.permute.xlu0 0
      %835 = vperm.xlu0 %834, %v785
      %v836 = vpop.permute.xlu0 %835
      %839 = vset.pattern.permute.xlu0 0
      %840 = vperm.xlu0 %839, %v786
      %v841 = vpop.permute.xlu0 %840
      %844 = vset.pattern.permute.xlu0 0
      %845 = vperm.xlu0 %844, %v787
      %v846 = vpop.permute.xlu0 %845
      %849 = vset.pattern.permute.xlu0 0
      %850 = vperm.xlu0 %849, %v788
      %v851 = vpop.permute.xlu0 %850
      %v853 = vsub.f32 %v421, %v816
      %v854 = vsub.f32 %v467, %v821
      %v855 = vsub.f32 %v513, %v826
      %v856 = vsub.f32 %v559, %v831
      %v857 = vsub.f32 %v605, %v836
      %v858 = vsub.f32 %v651, %v841
      %v859 = vsub.f32 %v697, %v846
      %v860 = vsub.f32 %v743, %v851
      %v861 = vmul.f32 %v853, 1.442695
      %v862 = vpow.pop %v861
      %v863 = vmul.f32 %v854, 1.442695
      %v864 = vpow.pop %v863
      %v865 = vmul.f32 %v855, 1.442695
      %v866 = vpow.pop %v865
      %v867 = vmul.f32 %v856, 1.442695
      %v868 = vpow.pop %v867
      %v869 = vmul.f32 %v857, 1.442695
      %v870 = vpow.pop %v869
      %v871 = vmul.f32 %v858, 1.442695
      %v872 = vpow.pop %v871
      %v873 = vmul.f32 %v859, 1.442695
      %v874 = vpow.pop %v873
      %v875 = vmul.f32 %v860, 1.442695
      %v876 = vpow.pop %v875
      %v877 = vld [vmem:[#allocation3] sm:$0xff]
      %v878 = vld [vmem:[#allocation3 + $0x8] sm:$0xff]
      %v879 = vld [vmem:[#allocation3 + $0x10] sm:$0xff]
      %v880 = vld [vmem:[#allocation3 + $0x18] sm:$0xff]
      %v881 = vld [vmem:[#allocation3 + $0x20] sm:$0xff]
      %v882 = vld [vmem:[#allocation3 + $0x28] sm:$0xff]
      %v883 = vld [vmem:[#allocation3 + $0x30] sm:$0xff]
      %v884 = vld [vmem:[#allocation3 + $0x38] sm:$0xff]
      %v885 = vmul.f32 %v798, %v877
      %v886 = vmul.f32 %v800, %v878
      %v887 = vmul.f32 %v802, %v879
      %v888 = vmul.f32 %v804, %v880
      %v889 = vmul.f32 %v806, %v881
      %v890 = vmul.f32 %v808, %v882
      %v891 = vmul.f32 %v810, %v883
      %v892 = vmul.f32 %v812, %v884
      %v893 = vsel %vm756, %v862, 0.0
      %894 = vadd.xlane.f32.xlu0 %v893
      %v895 = vpop.xlane.xlu0 %894
      %v896 = vsel %vm756, %v864, 0.0
      %897 = vadd.xlane.f32.xlu0 %v896
      %v898 = vpop.xlane.xlu0 %897
      %v899 = vsel %vm756, %v866, 0.0
      %900 = vadd.xlane.f32.xlu0 %v899
      %v901 = vpop.xlane.xlu0 %900
      %v902 = vsel %vm756, %v868, 0.0
      %903 = vadd.xlane.f32.xlu0 %v902
      %v904 = vpop.xlane.xlu0 %903
      %v905 = vsel %vm756, %v870, 0.0
      %906 = vadd.xlane.f32.xlu0 %v905
      %v907 = vpop.xlane.xlu0 %906
      %v908 = vsel %vm756, %v872, 0.0
      %909 = vadd.xlane.f32.xlu0 %v908
      %v910 = vpop.xlane.xlu0 %909
      %v911 = vsel %vm756, %v874, 0.0
      %912 = vadd.xlane.f32.xlu0 %v911
      %v913 = vpop.xlane.xlu0 %912
      %v914 = vsel %vm756, %v876, 0.0
      %915 = vadd.xlane.f32.xlu0 %v914
      %v916 = vpop.xlane.xlu0 %915
      %v917 = vadd.f32 %v885, %v895
      %v918 = vadd.f32 %v886, %v898
      %v919 = vadd.f32 %v887, %v901
      %v920 = vadd.f32 %v888, %v904
      %v921 = vadd.f32 %v889, %v907
      %v922 = vadd.f32 %v890, %v910
      %v923 = vadd.f32 %v891, %v913
      %v924 = vadd.f32 %v892, %v916
      %vm925 = vcmask 7168
      %926 = vst.msk [vmem:[#allocation3] sm:$0xff] %vm925, %v917
      %927 = vst.msk [vmem:[#allocation3 + $0x8] sm:$0xff] %vm925, %v918
      %928 = vst.msk [vmem:[#allocation3 + $0x10] sm:$0xff] %vm925, %v919
      %929 = vst.msk [vmem:[#allocation3 + $0x18] sm:$0xff] %vm925, %v920
      %930 = vst.msk [vmem:[#allocation3 + $0x20] sm:$0xff] %vm925, %v921
      %931 = vst.msk [vmem:[#allocation3 + $0x28] sm:$0xff] %vm925, %v922
      %932 = vst.msk [vmem:[#allocation3 + $0x30] sm:$0xff] %vm925, %v923
      %933 = vst.msk [vmem:[#allocation3 + $0x38] sm:$0xff] %vm925, %v924
      %v934 = vld [vmem:[#allocation4] sm:$0xff]
      %v935 = vld [vmem:[#allocation4 + $0x8] sm:$0xff]
      %v936 = vld [vmem:[#allocation4 + $0x10] sm:$0xff]
      %v937 = vld [vmem:[#allocation4 + $0x18] sm:$0xff]
      %v938 = vld [vmem:[#allocation4 + $0x20] sm:$0xff]
      %v939 = vld [vmem:[#allocation4 + $0x28] sm:$0xff]
      %v940 = vld [vmem:[#allocation4 + $0x30] sm:$0xff]
      %v941 = vld [vmem:[#allocation4 + $0x38] sm:$0xff]
      %943 = vset.pattern.permute.xlu0 0
      %944 = vperm.xlu0 %943, %v798
      %v945 = vpop.permute.xlu0 %944
      %948 = vset.pattern.permute.xlu0 0
      %949 = vperm.xlu0 %948, %v800
      %v950 = vpop.permute.xlu0 %949
      %953 = vset.pattern.permute.xlu0 0
      %954 = vperm.xlu0 %953, %v802
      %v955 = vpop.permute.xlu0 %954
      %958 = vset.pattern.permute.xlu0 0
      %959 = vperm.xlu0 %958, %v804
      %v960 = vpop.permute.xlu0 %959
      %963 = vset.pattern.permute.xlu0 0
      %964 = vperm.xlu0 %963, %v806
      %v965 = vpop.permute.xlu0 %964
      %968 = vset.pattern.permute.xlu0 0
      %969 = vperm.xlu0 %968, %v808
      %v970 = vpop.permute.xlu0 %969
      %973 = vset.pattern.permute.xlu0 0
      %974 = vperm.xlu0 %973, %v810
      %v975 = vpop.permute.xlu0 %974
      %978 = vset.pattern.permute.xlu0 0
      %979 = vperm.xlu0 %978, %v812
      %v980 = vpop.permute.xlu0 %979
      %v982 = vmul.f32 %v945, %v934
      %v983 = vmul.f32 %v950, %v935
      %v984 = vmul.f32 %v955, %v936
      %v985 = vmul.f32 %v960, %v937
      %v986 = vmul.f32 %v965, %v938
      %v987 = vmul.f32 %v970, %v939
      %v988 = vmul.f32 %v975, %v940
      %v989 = vmul.f32 %v980, %v941
      %v990 = vpack.c.bf16 %v862, %v862
      %v991 = vpack.c.bf16 %v864, %v864
      %v992 = vpack.c.bf16 %v866, %v866
      %v993 = vpack.c.bf16 %v868, %v868
      %v994 = vpack.c.bf16 %v870, %v870
      %v995 = vpack.c.bf16 %v872, %v872
      %v996 = vpack.c.bf16 %v874, %v874
      %v997 = vpack.c.bf16 %v876, %v876
      %v998 = vld [vmem:[%s320] sm:$0xf]
      %v999 = vld [vmem:[%s320 + $0x4] sm:$0xf]
      %v1000 = vld [vmem:[%s320 + $0x8] sm:$0xf]
      %v1001 = vld [vmem:[%s320 + $0xc] sm:$0xf]
      %v1002 = vld [vmem:[%s320 + $0x10] sm:$0xf]
      %v1003 = vld [vmem:[%s320 + $0x14] sm:$0xf]
      %v1004 = vld [vmem:[%s320 + $0x18] sm:$0xf]
      %v1005 = vld [vmem:[%s320 + $0x1c] sm:$0xf]
      %v1007 = vsel %vm756, %v990, 0
      %vm1009 = vcmask 1043456
      %v1011 = vsel %vm1009, %v998, 0
      %1013 = vmatprep.subr.bf16.mxu0 0
      %1014 = vmatpush1.bf16.msra.mxu0 %v1011
      %1015 = vmatprep.subr.bf16.mxu0 0
      %1016 = vmatpush1.bf16.msra.mxu0 0
      %1017 = vmatprep.subr.bf16.mxu0 0
      %1018 = vmatpush1.bf16.msra.mxu0 0
      %1019 = vmatprep.subr.bf16.mxu0 0
      %1020 = vmatpush1.bf16.msra.mxu0 0
      %1021 = vmatprep.subr.bf16.mxu0 0
      %1022 = vmatpush1.bf16.msra.mxu0 0
      %1023 = vmatprep.subr.bf16.mxu0 0
      %1024 = vmatpush1.bf16.msra.mxu0 0
      %1025 = vmatprep.subr.bf16.mxu0 0
      %1026 = vmatpush1.bf16.msra.mxu0 0
      %1027 = vmatprep.subr.bf16.mxu0 0
      %1028 = vmatpush1.bf16.msra.mxu0 0
      %1029 = vmatprep.subr.bf16.mxu0 0
      %1030 = vmatpush1.bf16.msra.mxu0 0
      %1031 = vmatprep.subr.bf16.mxu0 0
      %1032 = vmatpush1.bf16.msra.mxu0 0
      %1033 = vmatprep.subr.bf16.mxu0 0
      %1034 = vmatpush1.bf16.msra.mxu0 0
      %1035 = vmatprep.subr.bf16.mxu0 0
      %1036 = vmatpush1.bf16.msra.mxu0 0
      %1037 = vmatprep.subr.bf16.mxu0 0
      %1038 = vmatpush1.bf16.msra.mxu0 0
      %1039 = vmatprep.subr.bf16.mxu0 0
      %1040 = vmatpush1.bf16.msra.mxu0 0
      %1041 = vmatprep.subr.bf16.mxu0 0
      %1042 = vmatpush1.bf16.msra.mxu0 0
      %1043 = vmatprep.subr.bf16.mxu0 0
      %1044 = vmatpush1.bf16.msra.mxu0 0
      %1045 = vmatprep.mubr.bf16.mxu0 0
      %1046 = vmatmul.mubr.bf16.gmra.mrb[0].mxu0 %v1007
      %v1047 = vpop.f32.mrb[0].mxu0
      %v1048 = vadd.f32 0.0, %v1047
      %v1049 = vpop.f32.mrb[0].mxu0
      %v1050 = vpop.f32.mrb[0].mxu0
      %v1051 = vpop.f32.mrb[0].mxu0
      %1052 = vdwg.mxu0
      %v1054 = vsel %vm756, %v991, 0
      %v1057 = vsel %vm1009, %v999, 0
      %1059 = vmatprep.subr.bf16.mxu0 0
      %1060 = vmatpush1.bf16.msra.mxu0 %v1057
      %1061 = vmatprep.subr.bf16.mxu0 0
      %1062 = vmatpush1.bf16.msra.mxu0 0
      %1063 = vmatprep.subr.bf16.mxu0 0
      %1064 = vmatpush1.bf16.msra.mxu0 0
      %1065 = vmatprep.subr.bf16.mxu0 0
      %1066 = vmatpush1.bf16.msra.mxu0 0
      %1067 = vmatprep.subr.bf16.mxu0 0
      %1068 = vmatpush1.bf16.msra.mxu0 0
      %1069 = vmatprep.subr.bf16.mxu0 0
      %1070 = vmatpush1.bf16.msra.mxu0 0
      %1071 = vmatprep.subr.bf16.mxu0 0
      %1072 = vmatpush1.bf16.msra.mxu0 0
      %1073 = vmatprep.subr.bf16.mxu0 0
      %1074 = vmatpush1.bf16.msra.mxu0 0
      %1075 = vmatprep.subr.bf16.mxu0 0
      %1076 = vmatpush1.bf16.msra.mxu0 0
      %1077 = vmatprep.subr.bf16.mxu0 0
      %1078 = vmatpush1.bf16.msra.mxu0 0
      %1079 = vmatprep.subr.bf16.mxu0 0
      %1080 = vmatpush1.bf16.msra.mxu0 0
      %1081 = vmatprep.subr.bf16.mxu0 0
      %1082 = vmatpush1.bf16.msra.mxu0 0
      %1083 = vmatprep.subr.bf16.mxu0 0
      %1084 = vmatpush1.bf16.msra.mxu0 0
      %1085 = vmatprep.subr.bf16.mxu0 0
      %1086 = vmatpush1.bf16.msra.mxu0 0
      %1087 = vmatprep.subr.bf16.mxu0 0
      %1088 = vmatpush1.bf16.msra.mxu0 0
      %1089 = vmatprep.subr.bf16.mxu0 0
      %1090 = vmatpush1.bf16.msra.mxu0 0
      %1091 = vmatprep.mubr.bf16.mxu0 0
      %1092 = vmatmul.mubr.bf16.gmra.mrb[0].mxu0 %v1054
      %v1093 = vpop.f32.mrb[0].mxu0
      %v1094 = vadd.f32 0.0, %v1093
      %v1095 = vpop.f32.mrb[0].mxu0
      %v1096 = vpop.f32.mrb[0].mxu0
      %v1097 = vpop.f32.mrb[0].mxu0
      %1098 = vdwg.mxu0
      %v1100 = vsel %vm756, %v992, 0
      %v1103 = vsel %vm1009, %v1000, 0
      %1105 = vmatprep.subr.bf16.mxu0 0
      %1106 = vmatpush1.bf16.msra.mxu0 %v1103
      %1107 = vmatprep.subr.bf16.mxu0 0
      %1108 = vmatpush1.bf16.msra.mxu0 0
      %1109 = vmatprep.subr.bf16.mxu0 0
      %1110 = vmatpush1.bf16.msra.mxu0 0
      %1111 = vmatprep.subr.bf16.mxu0 0
      %1112 = vmatpush1.bf16.msra.mxu0 0
      %1113 = vmatprep.subr.bf16.mxu0 0
      %1114 = vmatpush1.bf16.msra.mxu0 0
      %1115 = vmatprep.subr.bf16.mxu0 0
      %1116 = vmatpush1.bf16.msra.mxu0 0
      %1117 = vmatprep.subr.bf16.mxu0 0
      %1118 = vmatpush1.bf16.msra.mxu0 0
      %1119 = vmatprep.subr.bf16.mxu0 0
      %1120 = vmatpush1.bf16.msra.mxu0 0
      %1121 = vmatprep.subr.bf16.mxu0 0
      %1122 = vmatpush1.bf16.msra.mxu0 0
      %1123 = vmatprep.subr.bf16.mxu0 0
      %1124 = vmatpush1.bf16.msra.mxu0 0
      %1125 = vmatprep.subr.bf16.mxu0 0
      %1126 = vmatpush1.bf16.msra.mxu0 0
      %1127 = vmatprep.subr.bf16.mxu0 0
      %1128 = vmatpush1.bf16.msra.mxu0 0
      %1129 = vmatprep.subr.bf16.mxu0 0
      %1130 = vmatpush1.bf16.msra.mxu0 0
      %1131 = vmatprep.subr.bf16.mxu0 0
      %1132 = vmatpush1.bf16.msra.mxu0 0
      %1133 = vmatprep.subr.bf16.mxu0 0
      %1134 = vmatpush1.bf16.msra.mxu0 0
      %1135 = vmatprep.subr.bf16.mxu0 0
      %1136 = vmatpush1.bf16.msra.mxu0 0
      %1137 = vmatprep.mubr.bf16.mxu0 0
      %1138 = vmatmul.mubr.bf16.gmra.mrb[0].mxu0 %v1100
      %v1139 = vpop.f32.mrb[0].mxu0
      %v1140 = vadd.f32 0.0, %v1139
      %v1141 = vpop.f32.mrb[0].mxu0
      %v1142 = vpop.f32.mrb[0].mxu0
      %v1143 = vpop.f32.mrb[0].mxu0
      %1144 = vdwg.mxu0
      %v1146 = vsel %vm756, %v993, 0
      %v1149 = vsel %vm1009, %v1001, 0
      %1151 = vmatprep.subr.bf16.mxu0 0
      %1152 = vmatpush1.bf16.msra.mxu0 %v1149
      %1153 = vmatprep.subr.bf16.mxu0 0
      %1154 = vmatpush1.bf16.msra.mxu0 0
      %1155 = vmatprep.subr.bf16.mxu0 0
      %1156 = vmatpush1.bf16.msra.mxu0 0
      %1157 = vmatprep.subr.bf16.mxu0 0
      %1158 = vmatpush1.bf16.msra.mxu0 0
      %1159 = vmatprep.subr.bf16.mxu0 0
      %1160 = vmatpush1.bf16.msra.mxu0 0
      %1161 = vmatprep.subr.bf16.mxu0 0
      %1162 = vmatpush1.bf16.msra.mxu0 0
      %1163 = vmatprep.subr.bf16.mxu0 0
      %1164 = vmatpush1.bf16.msra.mxu0 0
      %1165 = vmatprep.subr.bf16.mxu0 0
      %1166 = vmatpush1.bf16.msra.mxu0 0
      %1167 = vmatprep.subr.bf16.mxu0 0
      %1168 = vmatpush1.bf16.msra.mxu0 0
      %1169 = vmatprep.subr.bf16.mxu0 0
      %1170 = vmatpush1.bf16.msra.mxu0 0
      %1171 = vmatprep.subr.bf16.mxu0 0
      %1172 = vmatpush1.bf16.msra.mxu0 0
      %1173 = vmatprep.subr.bf16.mxu0 0
      %1174 = vmatpush1.bf16.msra.mxu0 0
      %1175 = vmatprep.subr.bf16.mxu0 0
      %1176 = vmatpush1.bf16.msra.mxu0 0
      %1177 = vmatprep.subr.bf16.mxu0 0
      %1178 = vmatpush1.bf16.msra.mxu0 0
      %1179 = vmatprep.subr.bf16.mxu0 0
      %1180 = vmatpush1.bf16.msra.mxu0 0
      %1181 = vmatprep.subr.bf16.mxu0 0
      %1182 = vmatpush1.bf16.msra.mxu0 0
      %1183 = vmatprep.mubr.bf16.mxu0 0
      %1184 = vmatmul.mubr.bf16.gmra.mrb[0].mxu0 %v1146
      %v1185 = vpop.f32.mrb[0].mxu0
      %v1186 = vadd.f32 0.0, %v1185
      %v1187 = vpop.f32.mrb[0].mxu0
      %v1188 = vpop.f32.mrb[0].mxu0
      %v1189 = vpop.f32.mrb[0].mxu0
      %1190 = vdwg.mxu0
      %v1192 = vsel %vm756, %v994, 0
      %v1195 = vsel %vm1009, %v1002, 0
      %1197 = vmatprep.subr.bf16.mxu0 0
      %1198 = vmatpush1.bf16.msra.mxu0 %v1195
      %1199 = vmatprep.subr.bf16.mxu0 0
      %1200 = vmatpush1.bf16.msra.mxu0 0
      %1201 = vmatprep.subr.bf16.mxu0 0
      %1202 = vmatpush1.bf16.msra.mxu0 0
      %1203 = vmatprep.subr.bf16.mxu0 0
      %1204 = vmatpush1.bf16.msra.mxu0 0
      %1205 = vmatprep.subr.bf16.mxu0 0
      %1206 = vmatpush1.bf16.msra.mxu0 0
      %1207 = vmatprep.subr.bf16.mxu0 0
      %1208 = vmatpush1.bf16.msra.mxu0 0
      %1209 = vmatprep.subr.bf16.mxu0 0
      %1210 = vmatpush1.bf16.msra.mxu0 0
      %1211 = vmatprep.subr.bf16.mxu0 0
      %1212 = vmatpush1.bf16.msra.mxu0 0
      %1213 = vmatprep.subr.bf16.mxu0 0
      %1214 = vmatpush1.bf16.msra.mxu0 0
      %1215 = vmatprep.subr.bf16.mxu0 0
      %1216 = vmatpush1.bf16.msra.mxu0 0
      %1217 = vmatprep.subr.bf16.mxu0 0
      %1218 = vmatpush1.bf16.msra.mxu0 0
      %1219 = vmatprep.subr.bf16.mxu0 0
      %1220 = vmatpush1.bf16.msra.mxu0 0
      %1221 = vmatprep.subr.bf16.mxu0 0
      %1222 = vmatpush1.bf16.msra.mxu0 0
      %1223 = vmatprep.subr.bf16.mxu0 0
      %1224 = vmatpush1.bf16.msra.mxu0 0
      %1225 = vmatprep.subr.bf16.mxu0 0
      %1226 = vmatpush1.bf16.msra.mxu0 0
      %1227 = vmatprep.subr.bf16.mxu0 0
      %1228 = vmatpush1.bf16.msra.mxu0 0
      %1229 = vmatprep.mubr.bf16.mxu0 0
      %1230 = vmatmul.mubr.bf16.gmra.mrb[0].mxu0 %v1192
      %v1231 = vpop.f32.mrb[0].mxu0
      %v1232 = vadd.f32 0.0, %v1231
      %v1233 = vpop.f32.mrb[0].mxu0
      %v1234 = vpop.f32.mrb[0].mxu0
      %v1235 = vpop.f32.mrb[0].mxu0
      %1236 = vdwg.mxu0
      %v1238 = vsel %vm756, %v995, 0
      %v1241 = vsel %vm1009, %v1003, 0
      %1243 = vmatprep.subr.bf16.mxu0 0
      %1244 = vmatpush1.bf16.msra.mxu0 %v1241
      %1245 = vmatprep.subr.bf16.mxu0 0
      %1246 = vmatpush1.bf16.msra.mxu0 0
      %1247 = vmatprep.subr.bf16.mxu0 0
      %1248 = vmatpush1.bf16.msra.mxu0 0
      %1249 = vmatprep.subr.bf16.mxu0 0
      %1250 = vmatpush1.bf16.msra.mxu0 0
      %1251 = vmatprep.subr.bf16.mxu0 0
      %1252 = vmatpush1.bf16.msra.mxu0 0
      %1253 = vmatprep.subr.bf16.mxu0 0
      %1254 = vmatpush1.bf16.msra.mxu0 0
      %1255 = vmatprep.subr.bf16.mxu0 0
      %1256 = vmatpush1.bf16.msra.mxu0 0
      %1257 = vmatprep.subr.bf16.mxu0 0
      %1258 = vmatpush1.bf16.msra.mxu0 0
      %1259 = vmatprep.subr.bf16.mxu0 0
      %1260 = vmatpush1.bf16.msra.mxu0 0
      %1261 = vmatprep.subr.bf16.mxu0 0
      %1262 = vmatpush1.bf16.msra.mxu0 0
      %1263 = vmatprep.subr.bf16.mxu0 0
      %1264 = vmatpush1.bf16.msra.mxu0 0
      %1265 = vmatprep.subr.bf16.mxu0 0
      %1266 = vmatpush1.bf16.msra.mxu0 0
      %1267 = vmatprep.subr.bf16.mxu0 0
      %1268 = vmatpush1.bf16.msra.mxu0 0
      %1269 = vmatprep.subr.bf16.mxu0 0
      %1270 = vmatpush1.bf16.msra.mxu0 0
      %1271 = vmatprep.subr.bf16.mxu0 0
      %1272 = vmatpush1.bf16.msra.mxu0 0
      %1273 = vmatprep.subr.bf16.mxu0 0
      %1274 = vmatpush1.bf16.msra.mxu0 0
      %1275 = vmatprep.mubr.bf16.mxu0 0
      %1276 = vmatmul.mubr.bf16.gmra.mrb[0].mxu0 %v1238
      %v1277 = vpop.f32.mrb[0].mxu0
      %v1278 = vadd.f32 0.0, %v1277
      %v1279 = vpop.f32.mrb[0].mxu0
      %v1280 = vpop.f32.mrb[0].mxu0
      %v1281 = vpop.f32.mrb[0].mxu0
      %1282 = vdwg.mxu0
      %v1284 = vsel %vm756, %v996, 0
      %v1287 = vsel %vm1009, %v1004, 0
      %1289 = vmatprep.subr.bf16.mxu0 0
      %1290 = vmatpush1.bf16.msra.mxu0 %v1287
      %1291 = vmatprep.subr.bf16.mxu0 0
      %1292 = vmatpush1.bf16.msra.mxu0 0
      %1293 = vmatprep.subr.bf16.mxu0 0
      %1294 = vmatpush1.bf16.msra.mxu0 0
      %1295 = vmatprep.subr.bf16.mxu0 0
      %1296 = vmatpush1.bf16.msra.mxu0 0
      %1297 = vmatprep.subr.bf16.mxu0 0
      %1298 = vmatpush1.bf16.msra.mxu0 0
      %1299 = vmatprep.subr.bf16.mxu0 0
      %1300 = vmatpush1.bf16.msra.mxu0 0
      %1301 = vmatprep.subr.bf16.mxu0 0
      %1302 = vmatpush1.bf16.msra.mxu0 0
      %1303 = vmatprep.subr.bf16.mxu0 0
      %1304 = vmatpush1.bf16.msra.mxu0 0
      %1305 = vmatprep.subr.bf16.mxu0 0
      %1306 = vmatpush1.bf16.msra.mxu0 0
      %1307 = vmatprep.subr.bf16.mxu0 0
      %1308 = vmatpush1.bf16.msra.mxu0 0
      %1309 = vmatprep.subr.bf16.mxu0 0
      %1310 = vmatpush1.bf16.msra.mxu0 0
      %1311 = vmatprep.subr.bf16.mxu0 0
      %1312 = vmatpush1.bf16.msra.mxu0 0
      %1313 = vmatprep.subr.bf16.mxu0 0
      %1314 = vmatpush1.bf16.msra.mxu0 0
      %1315 = vmatprep.subr.bf16.mxu0 0
      %1316 = vmatpush1.bf16.msra.mxu0 0
      %1317 = vmatprep.subr.bf16.mxu0 0
      %1318 = vmatpush1.bf16.msra.mxu0 0
      %1319 = vmatprep.subr.bf16.mxu0 0
      %1320 = vmatpush1.bf16.msra.mxu0 0
      %1321 = vmatprep.mubr.bf16.mxu0 0
      %1322 = vmatmul.mubr.bf16.gmra.mrb[0].mxu0 %v1284
      %v1323 = vpop.f32.mrb[0].mxu0
      %v1324 = vadd.f32 0.0, %v1323
      %v1325 = vpop.f32.mrb[0].mxu0
      %v1326 = vpop.f32.mrb[0].mxu0
      %v1327 = vpop.f32.mrb[0].mxu0
      %1328 = vdwg.mxu0
      %v1330 = vsel %vm756, %v997, 0
      %v1333 = vsel %vm1009, %v1005, 0
      %1335 = vmatprep.subr.bf16.mxu0 0
      %1336 = vmatpush1.bf16.msra.mxu0 %v1333
      %1337 = vmatprep.subr.bf16.mxu0 0
      %1338 = vmatpush1.bf16.msra.mxu0 0
      %1339 = vmatprep.subr.bf16.mxu0 0
      %1340 = vmatpush1.bf16.msra.mxu0 0
      %1341 = vmatprep.subr.bf16.mxu0 0
      %1342 = vmatpush1.bf16.msra.mxu0 0
      %1343 = vmatprep.subr.bf16.mxu0 0
      %1344 = vmatpush1.bf16.msra.mxu0 0
      %1345 = vmatprep.subr.bf16.mxu0 0
      %1346 = vmatpush1.bf16.msra.mxu0 0
      %1347 = vmatprep.subr.bf16.mxu0 0
      %1348 = vmatpush1.bf16.msra.mxu0 0
      %1349 = vmatprep.subr.bf16.mxu0 0
      %1350 = vmatpush1.bf16.msra.mxu0 0
      %1351 = vmatprep.subr.bf16.mxu0 0
      %1352 = vmatpush1.bf16.msra.mxu0 0
      %1353 = vmatprep.subr.bf16.mxu0 0
      %1354 = vmatpush1.bf16.msra.mxu0 0
      %1355 = vmatprep.subr.bf16.mxu0 0
      %1356 = vmatpush1.bf16.msra.mxu0 0
      %1357 = vmatprep.subr.bf16.mxu0 0
      %1358 = vmatpush1.bf16.msra.mxu0 0
      %1359 = vmatprep.subr.bf16.mxu0 0
      %1360 = vmatpush1.bf16.msra.mxu0 0
      %1361 = vmatprep.subr.bf16.mxu0 0
      %1362 = vmatpush1.bf16.msra.mxu0 0
      %1363 = vmatprep.subr.bf16.mxu0 0
      %1364 = vmatpush1.bf16.msra.mxu0 0
      %1365 = vmatprep.subr.bf16.mxu0 0
      %1366 = vmatpush1.bf16.msra.mxu0 0
      %1367 = vmatprep.mubr.bf16.mxu0 0
      %1368 = vmatmul.mubr.bf16.gmra.mrb[0].mxu0 %v1330
      %v1369 = vpop.f32.mrb[0].mxu0
      %v1370 = vadd.f32 0.0, %v1369
      %v1371 = vpop.f32.mrb[0].mxu0
      %v1372 = vpop.f32.mrb[0].mxu0
      %v1373 = vpop.f32.mrb[0].mxu0
      %1374 = vdwg.mxu0
      %v1375 = vadd.f32 %v982, %v1048
      %v1376 = vadd.f32 %v983, %v1094
      %v1377 = vadd.f32 %v984, %v1140
      %v1378 = vadd.f32 %v985, %v1186
      %v1379 = vadd.f32 %v986, %v1232
      %v1380 = vadd.f32 %v987, %v1278
      %v1381 = vadd.f32 %v988, %v1324
      %v1382 = vadd.f32 %v989, %v1370
      %1383 = vst.msk [vmem:[#allocation4] sm:$0xff] %vm379, %v1375
      %1384 = vst.msk [vmem:[#allocation4 + $0x8] sm:$0xff] %vm379, %v1376
      %1385 = vst.msk [vmem:[#allocation4 + $0x10] sm:$0xff] %vm379, %v1377
      %1386 = vst.msk [vmem:[#allocation4 + $0x18] sm:$0xff] %vm379, %v1378
      %1387 = vst.msk [vmem:[#allocation4 + $0x20] sm:$0xff] %vm379, %v1379
      %1388 = vst.msk [vmem:[#allocation4 + $0x28] sm:$0xff] %vm379, %v1380
      %1389 = vst.msk [vmem:[#allocation4 + $0x30] sm:$0xff] %vm379, %v1381
      %1390 = vst.msk [vmem:[#allocation4 + $0x38] sm:$0xff] %vm379, %v1382
      %1391 = vst.msk [vmem:[#allocation2] sm:$0xff] %vm925, %v781
      %1392 = vst.msk [vmem:[#allocation2 + $0x8] sm:$0xff] %vm925, %v782
      %1393 = vst.msk [vmem:[#allocation2 + $0x10] sm:$0xff] %vm925, %v783
      %1394 = vst.msk [vmem:[#allocation2 + $0x18] sm:$0xff] %vm925, %v784
      %1395 = vst.msk [vmem:[#allocation2 + $0x20] sm:$0xff] %vm925, %v785
      %1396 = vst.msk [vmem:[#allocation2 + $0x28] sm:$0xff] %vm925, %v786
      %1397 = vst.msk [vmem:[#allocation2 + $0x30] sm:$0xff] %vm925, %v787
      %1398 = vst.msk [vmem:[#allocation2 + $0x38] sm:$0xff] %vm925, %v788
      // Predicated region
      $region37: #{memory_efficient_attention.4} parent=31 // pred_check
        %p1399 = pneg %p333
      $region38: #{memory_efficient_attention.4} parent=31 // pred_check_branch
        %1401 = sbr.rel (%p1399) target = $region40
      $region39: #{memory_efficient_attention.4} parent=31 // pred_region
        %v1402 = vld [vmem:[#allocation4] sm:$0xff]
        %v1403 = vld [vmem:[#allocation4 + $0x8] sm:$0xff]
        %v1404 = vld [vmem:[#allocation4 + $0x10] sm:$0xff]
        %v1405 = vld [vmem:[#allocation4 + $0x18] sm:$0xff]
        %v1406 = vld [vmem:[#allocation4 + $0x20] sm:$0xff]
        %v1407 = vld [vmem:[#allocation4 + $0x28] sm:$0xff]
        %v1408 = vld [vmem:[#allocation4 + $0x30] sm:$0xff]
        %v1409 = vld [vmem:[#allocation4 + $0x38] sm:$0xff]
        %v1410 = vld [vmem:[#allocation3] sm:$0xff]
        %v1411 = vld [vmem:[#allocation3 + $0x8] sm:$0xff]
        %v1412 = vld [vmem:[#allocation3 + $0x10] sm:$0xff]
        %v1413 = vld [vmem:[#allocation3 + $0x18] sm:$0xff]
        %v1414 = vld [vmem:[#allocation3 + $0x20] sm:$0xff]
        %v1415 = vld [vmem:[#allocation3 + $0x28] sm:$0xff]
        %v1416 = vld [vmem:[#allocation3 + $0x30] sm:$0xff]
        %v1417 = vld [vmem:[#allocation3 + $0x38] sm:$0xff]
        %1419 = vset.pattern.permute.xlu0 0
        %1420 = vperm.xlu0 %1419, %v1410
        %v1421 = vpop.permute.xlu0 %1420
        %1424 = vset.pattern.permute.xlu0 0
        %1425 = vperm.xlu0 %1424, %v1411
        %v1426 = vpop.permute.xlu0 %1425
        %1429 = vset.pattern.permute.xlu0 0
        %1430 = vperm.xlu0 %1429, %v1412
        %v1431 = vpop.permute.xlu0 %1430
        %1434 = vset.pattern.permute.xlu0 0
        %1435 = vperm.xlu0 %1434, %v1413
        %v1436 = vpop.permute.xlu0 %1435
        %1439 = vset.pattern.permute.xlu0 0
        %1440 = vperm.xlu0 %1439, %v1414
        %v1441 = vpop.permute.xlu0 %1440
        %1444 = vset.pattern.permute.xlu0 0
        %1445 = vperm.xlu0 %1444, %v1415
        %v1446 = vpop.permute.xlu0 %1445
        %1449 = vset.pattern.permute.xlu0 0
        %1450 = vperm.xlu0 %1449, %v1416
        %v1451 = vpop.permute.xlu0 %1450
        %1454 = vset.pattern.permute.xlu0 0
        %1455 = vperm.xlu0 %1454, %v1417
        %v1456 = vpop.permute.xlu0 %1455
        %v1458 = vrcp.pop %v1421
        %v1459 = vmul.f32 %v1402, %v1458
        %v1460 = vrcp.pop %v1426
        %v1461 = vmul.f32 %v1403, %v1460
        %v1462 = vrcp.pop %v1431
        %v1463 = vmul.f32 %v1404, %v1462
        %v1464 = vrcp.pop %v1436
        %v1465 = vmul.f32 %v1405, %v1464
        %v1466 = vrcp.pop %v1441
        %v1467 = vmul.f32 %v1406, %v1466
        %v1468 = vrcp.pop %v1446
        %v1469 = vmul.f32 %v1407, %v1468
        %v1470 = vrcp.pop %v1451
        %v1471 = vmul.f32 %v1408, %v1470
        %v1472 = vrcp.pop %v1456
        %v1473 = vmul.f32 %v1409, %v1472
        %v1474 = vpack.c.bf16 %v1459, %v1459
        %v1475 = vpack.c.bf16 %v1461, %v1461
        %v1476 = vpack.c.bf16 %v1463, %v1463
        %v1477 = vpack.c.bf16 %v1465, %v1465
        %v1478 = vpack.c.bf16 %v1467, %v1467
        %v1479 = vpack.c.bf16 %v1469, %v1469
        %v1480 = vpack.c.bf16 %v1471, %v1471
        %v1481 = vpack.c.bf16 %v1473, %v1473
        %vm1482 = vcmask 27648
        %1483 = vst.msk [vmem:[%s331] sm:$0xf] %vm1482, %v1474
        %v1485 = vunpack.c.l.b16 %v1475
        %v1486 = vpack.c.b16 %v1485, %v1485
        %1487 = vrot.lane.b32.xlu0 %v1486, 4
        %v1488 = vpop.permute.xlu0 %1487
        %vm1490 = vcmask 60448
        %1491 = vst.msk [vmem:[%s331] sm:$0xf] %vm1490, %v1488
        %v1493 = vunpack.c.l.b16 %v1476
        %v1494 = vpack.c.b16 %v1493, %v1493
        %1495 = vrot.lane.b32.xlu0 %v1494, 8
        %v1496 = vpop.permute.xlu0 %1495
        %vm1498 = vcmask 93248
        %1499 = vst.msk [vmem:[%s331] sm:$0xf] %vm1498, %v1496
        %v1501 = vunpack.c.l.b16 %v1477
        %v1502 = vpack.c.b16 %v1501, %v1501
        %1503 = vrot.lane.b32.xlu0 %v1502, 12
        %v1504 = vpop.permute.xlu0 %1503
        %vm1506 = vcmask 126048
        %1507 = vst.msk [vmem:[%s331] sm:$0xf] %vm1506, %v1504
        %v1509 = vunpack.c.l.b16 %v1478
        %v1510 = vpack.c.b16 %v1509, %v1509
        %1511 = vrot.lane.b32.xlu0 %v1510, 16
        %v1512 = vpop.permute.xlu0 %1511
        %vm1514 = vcmask 158848
        %1515 = vst.msk [vmem:[%s331] sm:$0xf] %vm1514, %v1512
        %v1517 = vunpack.c.l.b16 %v1479
        %v1518 = vpack.c.b16 %v1517, %v1517
        %1519 = vrot.lane.b32.xlu0 %v1518, 20
        %v1520 = vpop.permute.xlu0 %1519
        %vm1522 = vcmask 191648
        %1523 = vst.msk [vmem:[%s331] sm:$0xf] %vm1522, %v1520
        %v1525 = vunpack.c.l.b16 %v1480
        %v1526 = vpack.c.b16 %v1525, %v1525
        %1527 = vrot.lane.b32.xlu0 %v1526, 24
        %v1528 = vpop.permute.xlu0 %1527
        %vm1530 = vcmask 224448
        %1531 = vst.msk [vmem:[%s331] sm:$0xf] %vm1530, %v1528
        %v1533 = vunpack.c.l.b16 %v1481
        %v1534 = vpack.c.b16 %v1533, %v1533
        %1535 = vrot.lane.b32.xlu0 %v1534, 28
        %v1536 = vpop.permute.xlu0 %1535
        %vm1538 = vcmask 257248
        %1539 = vst.msk [vmem:[%s331] sm:$0xf] %vm1538, %v1536
      $region40: #{memory_efficient_attention.4} parent=31 // pred_fallthru
        _
      %p1540 = scmp.lt.s32.totalorder %s20, 1
      %s1541 = scalar_select %p1540, %s20, 1
      %p1542 = scmp.lt.s32.totalorder %s22, 0
      %s1543 = scalar_select %p1542, %s22, 0
      %p1544 = scmp.lt.s32.totalorder %s21, 0
      %s1545 = scalar_select %p1544, %s21, 0
      %s1546 = sadd.s32 %s1545, %s1543
      %s1547 = sadd.s32 %s1546, %s1541
      %s1548 = smul.addr %s1547, 4
      %s1549 = scalar_lea.vmem %s3, %s1548
      // Predicated region
      $region41: #{memory_efficient_attention.4} parent=31 // pred_check
        %p1550 = pneg %p152
      $region42: #{memory_efficient_attention.4} parent=31 // pred_check_branch
        %1552 = sbr.rel (%p1550) target = $region44
      $region43: #{memory_efficient_attention.4} parent=31 // pred_region
        _
      $region44: #{memory_efficient_attention.4} parent=31 // pred_fallthru
        _
    $region32: #{memory_efficient_attention.4} parent=5 // pred_fallthru
      _
    %p1553 = scmp.le.s32.totalorder 2, %s9
    // Predicated region
    $region45: #{memory_efficient_attention.4} parent=5 // pred_check
      %p1554 = pneg %p1553
    $region46: #{memory_efficient_attention.4} parent=5 // pred_check_branch
      %1556 = sbr.rel (%p1554) target = $region48
    $region47: #{memory_efficient_attention.4} parent=5 // pred_region
      %s1557 = ssub.s32 %s9, 2
      // Predicated region
      $region49: #{memory_efficient_attention.4} parent=47 // pred_check
        %p1558 = pneg %p158
      $region50: #{memory_efficient_attention.4} parent=47 // pred_check_branch
        %1560 = sbr.rel (%p1558) target = $region52
      $region51: #{memory_efficient_attention.4} parent=47 // pred_region
        %p1561 = scmp.lt.s32.totalorder %s24, 1
        %s1562 = scalar_select %p1561, %s24, 1
        %p1563 = scmp.lt.s32.totalorder %s26, 0
        %s1564 = scalar_select %p1563, %s26, 0
        %p1565 = scmp.lt.s32.totalorder %s25, 0
        %s1566 = scalar_select %p1565, %s25, 0
        %s1567 = sadd.s32 %s1566, %s1564
        %s1568 = sadd.s32 %s1567, %s1562
        %s1569 = smul.addr %s1568, 4
        %s1570 = scalar_lea.vmem %s3, %s1569
      $region52: #{memory_efficient_attention.4} parent=47 // pred_fallthru
        _
    $region48: #{memory_efficient_attention.4} parent=5 // pred_fallthru
      _
  $region6: #{memory_efficient_attention.4} parent=0 // loop_footer
    %s13 = sadd.s32 1, %s9
  $region7: #{memory_efficient_attention.4} parent=0 // loop_footer_branch
    %8 = sbr.rel target = $region3
  $region8: #{memory_efficient_attention.4} parent=0 // loop_exit
    _

</llo_original>
